<compile_context>
chip_gen: v6e
topology: v6e:2x2x1
jax: 0.10.0
libtpu: 0.0.40
codegen_flags: <defaults>
</compile_context>

<pallas_src>
import functools

import jax
import jax.numpy as jnp
from jax import lax
from jax.experimental import pallas as pl
from jax.experimental.pallas import tpu as pltpu


def _round_up(x, m):
    return ((x + m - 1) // m) * m


def _pad_to(x, shape):
    return jnp.pad(x, [(0, s - d) for d, s in zip(x.shape, shape)])


def _tpu_topology():
    """Best-effort (device_kind, TensorCores/device, VMEM bytes). Never raises."""
    kind, num_tc, vmem_cap = "", 1, 128 * 1024 * 1024
    try:
        dev = jax.devices()[0]
        kind = str(getattr(dev, "device_kind", "") or "").lower()
        nc = getattr(dev, "num_cores", None)
        if nc:
            num_tc = max(1, int(nc))
        if "tpu" in kind and "7" in kind:          # v7x: 2 TCs, 64 MiB VMEM per TC
            num_tc = max(num_tc, 2)
            vmem_cap = 64 * 1024 * 1024
        elif ("v4" in kind) or ("v5p" in kind):    # megacore: 2 TCs
            num_tc = max(num_tc, 2)
    except Exception:
        pass
    return kind, num_tc, vmem_cap


def _rnn_base_kernel(*refs, num_layers, has_rest, use_log_softmax,
                     time_unroll, chunk_t):
    """Kernel body (all shapes padded to tile-friendly sizes).

    x_ref       : (T, TB, E)   embedded tokens (compute dtype), time-major, one batch tile
    wih0_ref    : (E, H)       layer-0 input weights, pre-transposed
    wih_rest_ref: (L-1, H, H)  layers 1..L-1 input weights, pre-transposed (only if L>1)
    whh_ref     : (L, H, H)    recurrent weights, pre-transposed
    b_ref       : (L, H)       pre-summed b_ih + b_hh (f32)
    wfc_ref     : (H, O)       final linear weight, pre-transposed
    bfc_ref     : (1, O)       final linear bias (padded lanes = -1e30), f32
    out_ref     : (TB, O)      output (log_)softmax, f32
    seq_ref     : (T, TB, H)   compute-dtype scratch: pre-activations, then layer outputs
    """
    if has_rest:
        (x_ref, wih0_ref, wih_rest_ref, whh_ref, b_ref, wfc_ref, bfc_ref,
         out_ref, seq_ref) = refs
    else:
        (x_ref, wih0_ref, whh_ref, b_ref, wfc_ref, bfc_ref,
         out_ref, seq_ref) = refs
        wih_rest_ref = None

    T, TB, E = x_ref.shape
    H = whh_ref.shape[1]
    L = num_layers
    cdt = seq_ref.dtype

    # Static time-chunk schedule for the bulk input projections.
    chunks = [(t0, min(chunk_t, T - t0)) for t0 in range(0, T, chunk_t)]

    def project_layer0():
        w = wih0_ref[...]
        b0 = b_ref[0]
        for t0, ct in chunks:
            xc = x_ref[pl.ds(t0, ct)].reshape(ct * TB, E)
            pre = jnp.dot(xc, w, preferred_element_type=jnp.float32) + b0
            seq_ref[pl.ds(t0, ct)] = pre.reshape(ct, TB, H).astype(cdt)

    def project_layer(l):
        w = wih_rest_ref[l - 1]
        bl = b_ref[l]
        for t0, ct in chunks:
            prev = seq_ref[pl.ds(t0, ct)].reshape(ct * TB, H)
            pre = jnp.dot(prev, w, preferred_element_type=jnp.float32) + bl
            seq_ref[pl.ds(t0, ct)] = pre.reshape(ct, TB, H).astype(cdt)

    def recur(whh_l):
        # Serial recurrence: h @ W_hh (f32 accumulate) + pre[t] -> tanh -> store.
        def step(t, h):
            pre = jnp.dot(h, whh_l, preferred_element_type=jnp.float32) + seq_ref[t]
            h_new = jnp.tanh(pre).astype(cdt)
            seq_ref[t] = h_new            # full (TB, H) lane-dense tile store
            return h_new
        return lax.fori_loop(0, T, step, jnp.zeros((TB, H), cdt),
                             unroll=time_unroll)

    # ---- layer 0 ----
    project_layer0()
    h = recur(whh_ref[0])

    # ---- layers 1..L-1 (input = previous layer's full output sequence, in place) ----
    for l in range(1, L):
        project_layer(l)
        h = recur(whh_ref[l])

    # h == h_out[:, -1, :] of the top layer (last timestep, batch_first)

    # ---- final linear + (log_)softmax over dim=1 (f32) ----
    fc = jnp.dot(h, wfc_ref[...], preferred_element_type=jnp.float32) + bfc_ref[0]
    m = jnp.max(fc, axis=1, keepdims=True)
    shifted = fc - m
    ex = jnp.exp(shifted)
    denom = jnp.sum(ex, axis=1, keepdims=True)
    if use_log_softmax:
        out_ref[...] = shifted - jnp.log(denom)
    else:
        out_ref[...] = ex * pl.reciprocal(denom, approx=False)


def rnn_base_forward(token, params, num_layers, use_log_softmax=True,
                     compute_dtype=jnp.bfloat16, batch_tile=None):
    """token: (B, T) int32.  Returns (B, output_size) float32."""
    emb = params["embed"]                  # (V, E)
    wih0 = params["wih0"]                  # (H, E)
    wih_rest = params["wih_rest"]          # (max(L-1,1), H, H)
    whh = params["whh"]                    # (L, H, H)
    bih = params["bih"]                    # (L, H)
    bhh = params["bhh"]                    # (L, H)
    wfc = params["wfc"]                    # (O, H)
    bfc = params["bfc"]                    # (1, O)

    B, T = token.shape
    L = num_layers
    H = whh.shape[1]
    E = emb.shape[1]
    O = wfc.shape[0]
    cbytes = jnp.dtype(compute_dtype).itemsize

    # Tile-friendly padded sizes: sublanes (batch) to 8, lanes (E/H/O) to 128.
    E_pad = _round_up(E, 128)
    H_pad = _round_up(H, 128)
    O_pad = _round_up(O, 128)
    B_pad8 = _round_up(B, 8)

    kind, num_tc, vmem_cap = _tpu_topology()

    if batch_tile is None:
        is_v5e = ("v5 lite" in kind) or ("v5e" in kind) or ("v5lite" in kind)
        cap = 128 if is_v5e else 256          # bigger tiles on single-TC v6e
        if num_tc >= 2:
            cap = min(cap, 128)               # multi-TC: smaller tiles, >=2 of them
        ntiles = pl.cdiv(B_pad8, cap)
        if B_pad8 >= 8 * num_tc:
            ntiles = max(ntiles, num_tc)      # let the "parallel" axis shard
        batch_tile = max(8, _round_up(pl.cdiv(B_pad8, ntiles), 8))

    n_rest = L - 1

    def pick_chunk(tb):
        # ~512 rows per bulk-projection chunk.
        return max(1, min(T, max(1, 512 // tb)))

    def vmem_need(tb, ct):
        weights = (E_pad * H_pad + (n_rest + L) * H_pad * H_pad
                   + H_pad * O_pad) * cbytes
        biases = (L * H_pad + O_pad) * 4
        return (2 * T * tb * E_pad * cbytes     # double-buffered x tile
                + 2 * (weights + biases)        # weights double-buffered by default
                + 2 * tb * O_pad * 4            # double-buffered out tile
                + T * tb * H_pad * cbytes       # seq scratch (compute dtype)
                + 2 * ct * tb * H_pad * 4       # chunked projection f32 temps
                + 4 * tb * H_pad * 4)           # carry / per-step temps

    chunk_t = pick_chunk(batch_tile)
    budget = int(0.80 * vmem_cap)
    while batch_tile > 8 and vmem_need(batch_tile, chunk_t) > budget:
        batch_tile = max(8, _round_up(batch_tile // 2, 8))
        chunk_t = pick_chunk(batch_tile)

    grid_b = pl.cdiv(B_pad8, batch_tile)
    B_pad = grid_b * batch_tile

    # Embedding gather (plain-JAX glue), directly in compute dtype & time-major order.
    x = jnp.take(emb.astype(compute_dtype), token.T, axis=0)      # (T, B, E)
    x = _pad_to(x, (T, B_pad, E_pad))

    # Loop-invariant layout work done once, wrapper-side.
    wih0_t = _pad_to(wih0.T, (E_pad, H_pad)).astype(compute_dtype)
    whh_t = _pad_to(jnp.swapaxes(whh, 1, 2),
                    (L, H_pad, H_pad)).astype(compute_dtype)
    bias = _pad_to((bih + bhh).astype(jnp.float32), (L, H_pad))
    wfc_t = _pad_to(wfc.T, (H_pad, O_pad)).astype(compute_dtype)
    # Padded output lanes get -1e30 bias so they vanish under (log_)softmax.
    bfc_pad = jnp.full((1, O_pad), -1e30, jnp.float32).at[:, :O].set(
        bfc.astype(jnp.float32))

    has_rest = L > 1
    inputs = [x, wih0_t]
    in_specs = [
        pl.BlockSpec((T, batch_tile, E_pad), lambda b: (0, b, 0)),
        pl.BlockSpec((E_pad, H_pad), lambda b: (0, 0)),
    ]
    if has_rest:
        wih_rest_t = _pad_to(jnp.swapaxes(wih_rest[:L - 1], 1, 2),
                             (L - 1, H_pad, H_pad)).astype(compute_dtype)
        inputs.append(wih_rest_t)
        in_specs.append(pl.BlockSpec((L - 1, H_pad, H_pad), lambda b: (0, 0, 0)))
    inputs += [whh_t, bias, wfc_t, bfc_pad]
    in_specs += [
        pl.BlockSpec((L, H_pad, H_pad), lambda b: (0, 0, 0)),
        pl.BlockSpec((L, H_pad), lambda b: (0, 0)),
        pl.BlockSpec((H_pad, O_pad), lambda b: (0, 0)),
        pl.BlockSpec((1, O_pad), lambda b: (0, 0)),
    ]
    out_specs = pl.BlockSpec((batch_tile, O_pad), lambda b: (b, 0))

    vmem_limit = int(min(max(int(1.5 * vmem_need(batch_tile, chunk_t)) + (8 << 20),
                             32 << 20),
                         int(0.85 * vmem_cap)))

    time_unroll = max(1, min(8, T))          # bounded unroll, uniform
    kernel = functools.partial(
        _rnn_base_kernel, num_layers=L, has_rest=has_rest,
        use_log_softmax=use_log_softmax, time_unroll=time_unroll,
        chunk_t=chunk_t)

    out = pl.pallas_call(
        kernel,
        out_shape=jax.ShapeDtypeStruct((B_pad, O_pad), jnp.float32),
        grid=(grid_b,),
        in_specs=in_specs,
        out_specs=out_specs,
        scratch_shapes=[pltpu.VMEM((T, batch_tile, H_pad), compute_dtype)],
        compiler_params=pltpu.CompilerParams(
            dimension_semantics=("parallel",),
            vmem_limit_bytes=vmem_limit),
    )(*inputs)
    return out[:B, :O]


def init_params(key, vocab_size, embed_dim, hidden_size, num_layers, output_size):
    ks = jax.random.split(key, 8)
    k_rnn = 1.0 / jnp.sqrt(hidden_size)
    k_fc = 1.0 / jnp.sqrt(hidden_size)
    n_rest = max(num_layers - 1, 1)
    params = {
        "embed": jax.random.normal(ks[0], (vocab_size, embed_dim), jnp.float32),
        "wih0": jax.random.uniform(ks[1], (hidden_size, embed_dim),
                                   jnp.float32, -k_rnn, k_rnn),
        "wih_rest": jax.random.uniform(ks[2], (n_rest, hidden_size, hidden_size),
                                       jnp.float32, -k_rnn, k_rnn),
        "whh": jax.random.uniform(ks[3], (num_layers, hidden_size, hidden_size),
                                  jnp.float32, -k_rnn, k_rnn),
        "bih": jax.random.uniform(ks[4], (num_layers, hidden_size),
                                  jnp.float32, -k_rnn, k_rnn),
        "bhh": jax.random.uniform(ks[5], (num_layers, hidden_size),
                                  jnp.float32, -k_rnn, k_rnn),
        "wfc": jax.random.uniform(ks[6], (output_size, hidden_size),
                                  jnp.float32, -k_fc, k_fc),
        "bfc": jax.random.uniform(ks[7], (1, output_size),
                                  jnp.float32, -k_fc, k_fc),
    }
    return params


def reference_forward(token, params, num_layers, use_log_softmax=True):
    """Pure-JAX reference (f32, unpadded) for correctness checking."""
    x = jnp.take(params["embed"], token, axis=0)     # (B, T, E)
    B, T, _ = x.shape
    H = params["whh"].shape[1]
    seq = x
    for l in range(num_layers):
        wih = params["wih0"] if l == 0 else params["wih_rest"][l - 1]
        whh = params["whh"][l]
        bih = params["bih"][l]
        bhh = params["bhh"][l]
        h = jnp.zeros((B, H), jnp.float32)
        outs = []
        for t in range(T):
            h = jnp.tanh(seq[:, t, :] @ wih.T + bih + h @ whh.T + bhh)
            outs.append(h)
        seq = jnp.stack(outs, axis=1)
    last = seq[:, -1, :]
    fc = last @ params["wfc"].T + params["bfc"][0]
    if use_log_softmax:
        return jax.nn.log_softmax(fc, axis=1)
    return jax.nn.softmax(fc, axis=1)


if __name__ == "__main__":
    vocab_size, embed_dim, hidden_size = 20, 16, 32
    num_layers, output_size = 2, 10
    B, T = 2, 8

    key = jax.random.PRNGKey(0)
    k_params, k_tok = jax.random.split(key)
    params = init_params(k_params, vocab_size, embed_dim, hidden_size,
                         num_layers, output_size)
    token = jax.random.randint(k_tok, (B, T), 0, vocab_size, dtype=jnp.int32)

    ref = reference_forward(token, params, num_layers, use_log_softmax=True)

    # f32 path: tight check against the reference (exact semantics).
    out_f32 = rnn_base_forward(token, params, num_layers, use_log_softmax=True,
                               compute_dtype=jnp.float32)
    out_f32 = jax.block_until_ready(out_f32)
    assert out_f32.shape == (B, output_size)
    assert jnp.allclose(out_f32, ref, atol=1e-4, rtol=1e-4), (out_f32, ref)

    # bf16 MXU path (default / performance path): looser tolerance — weights,
    # seq scratch and the recurrent carry are bf16 (accumulation stays f32).
    out_bf16 = rnn_base_forward(token, params, num_layers, use_log_softmax=True,
                                compute_dtype=jnp.bfloat16)
    out_bf16 = jax.block_until_ready(out_bf16)
    assert out_bf16.shape == (B, output_size)
    assert jnp.allclose(out_bf16, ref, atol=1e-1, rtol=1e-1), (out_bf16, ref)

    print("KERNEL_OK")
</pallas_src>

<mosaic_0001>
module attributes {stable_mosaic.version = 11 : i64} {
  func.func @_rnn_base_kernel(%arg0: i32, %arg1: memref<8x8x128xf32, #tpu.memory_space<vmem>>, %arg2: memref<128x128xf32, #tpu.memory_space<vmem>>, %arg3: memref<1x128x128xf32, #tpu.memory_space<vmem>>, %arg4: memref<2x128x128xf32, #tpu.memory_space<vmem>>, %arg5: memref<2x128xf32, #tpu.memory_space<vmem>>, %arg6: memref<128x128xf32, #tpu.memory_space<vmem>>, %arg7: memref<1x128xf32, #tpu.memory_space<vmem>>, %arg8: memref<8x128xf32, #tpu.memory_space<vmem>>, %arg9: memref<8x8x128xf32, #tpu.memory_space<vmem>>) attributes {dimension_semantics = [#tpu.dimension_semantics<parallel>], iteration_bounds = array<i64: 1>, scalar_prefetch = 0 : i64, scratch_operands = 1 : i64, tpu.core_type = #tpu.core_type<tc>, window_params = [{transform_indices = @transform_0, window_bounds = array<i64: 8, 8, 128>}, {pipeline_mode = #tpu.pipeline_mode<synchronous>, transform_indices = @transform_1, window_bounds = array<i64: 128, 128>}, {pipeline_mode = #tpu.pipeline_mode<synchronous>, transform_indices = @transform_2, window_bounds = array<i64: 1, 128, 128>}, {pipeline_mode = #tpu.pipeline_mode<synchronous>, transform_indices = @transform_3, window_bounds = array<i64: 2, 128, 128>}, {pipeline_mode = #tpu.pipeline_mode<synchronous>, transform_indices = @transform_4, window_bounds = array<i64: 2, 128>}, {pipeline_mode = #tpu.pipeline_mode<synchronous>, transform_indices = @transform_5, window_bounds = array<i64: 128, 128>}, {pipeline_mode = #tpu.pipeline_mode<synchronous>, transform_indices = @transform_6, window_bounds = array<i64: 1, 128>}, {transform_indices = @transform_7, window_bounds = array<i64: 8, 128>}]} {
    %c0 = arith.constant 0 : index
    %c0_0 = arith.constant 0 : index
    %0 = vector.load %arg2[%c0, %c0_0] : memref<128x128xf32, #tpu.memory_space<vmem>>, vector<128x128xf32>
    %c0_1 = arith.constant 0 : index
    %c0_2 = arith.constant 0 : index
    %1 = vector.load %arg5[%c0_1, %c0_2] : memref<2x128xf32, #tpu.memory_space<vmem>>, vector<1x128xf32>
    %2 = vector.shape_cast %1 : vector<1x128xf32> to vector<128xf32>
    %c0_3 = arith.constant 0 : index
    %c0_4 = arith.constant 0 : index
    %c0_5 = arith.constant 0 : index
    %3 = vector.load %arg1[%c0_3, %c0_4, %c0_5] : memref<8x8x128xf32, #tpu.memory_space<vmem>>, vector<8x8x128xf32>
    %4 = vector.shape_cast %3 : vector<8x8x128xf32> to vector<64x128xf32>
    %cst = arith.constant dense<0.000000e+00> : vector<64x128xf32>
    %5 = tpu.matmul %4, %0, %cst {dimension_numbers = #tpu.dot_dimension_numbers<[1], [0], [0], [1], [0, 0, 1, 1], [], []>} : vector<64x128xf32>, vector<128x128xf32>, vector<64x128xf32> -> vector<64x128xf32>
    %6 = vector.shape_cast %2 : vector<128xf32> to vector<1x128xf32>
    %7 = vector.broadcast %6 : vector<1x128xf32> to vector<64x128xf32>
    %8 = arith.addf %5, %7 : vector<64x128xf32>
    %9 = vector.shape_cast %8 : vector<64x128xf32> to vector<8x8x128xf32>
    %c0_6 = arith.constant 0 : index
    %c0_7 = arith.constant 0 : index
    %c0_8 = arith.constant 0 : index
    %10 = vector.load %arg9[%c0_6, %c0_7, %c0_8] : memref<8x8x128xf32, #tpu.memory_space<vmem>>, vector<8x8x128xf32>
    tpu.vector_store %arg9[%c0_6, %c0_7, %c0_8], %9 {strides = array<i32>} : memref<8x8x128xf32, #tpu.memory_space<vmem>>, vector<8x8x128xf32>,
    %c0_9 = arith.constant 0 : index
    %c0_10 = arith.constant 0 : index
    %c0_11 = arith.constant 0 : index
    %11 = vector.load %arg4[%c0_9, %c0_10, %c0_11] : memref<2x128x128xf32, #tpu.memory_space<vmem>>, vector<1x128x128xf32>
    %12 = vector.shape_cast %11 : vector<1x128x128xf32> to vector<128x128xf32>
    %cst_12 = arith.constant 0.000000e+00 : f32
    %13 = vector.broadcast %cst_12 : f32 to vector<8x128xf32>
    %c0_i32 = arith.constant 0 : i32
    %cst_13 = arith.constant dense<0.000000e+00> : vector<8x128xf32>
    %14 = tpu.matmul %13, %12, %cst_13 {dimension_numbers = #tpu.dot_dimension_numbers<[1], [0], [0], [1], [0, 0, 1, 1], [], []>} : vector<8x128xf32>, vector<128x128xf32>, vector<8x128xf32> -> vector<8x128xf32>
    %15 = arith.index_cast %c0_i32 : i32 to index
    %c0_14 = arith.constant 0 : index
    %c0_15 = arith.constant 0 : index
    %16 = vector.load %arg9[%15, %c0_14, %c0_15] : memref<8x8x128xf32, #tpu.memory_space<vmem>>, vector<1x8x128xf32>
    %17 = vector.shape_cast %16 : vector<1x8x128xf32> to vector<8x128xf32>
    %18 = arith.addf %14, %17 : vector<8x128xf32>
    %19 = math.tanh %18 : vector<8x128xf32>
    %20 = arith.index_cast %c0_i32 : i32 to index
    %c0_16 = arith.constant 0 : index
    %c0_17 = arith.constant 0 : index
    %21 = vector.load %arg9[%20, %c0_16, %c0_17] : memref<8x8x128xf32, #tpu.memory_space<vmem>>, vector<1x8x128xf32>
    %22 = vector.shape_cast %21 : vector<1x8x128xf32> to vector<8x128xf32>
    %23 = vector.shape_cast %19 : vector<8x128xf32> to vector<1x8x128xf32>
    tpu.vector_store %arg9[%20, %c0_16, %c0_17], %23 {strides = array<i32>} : memref<8x8x128xf32, #tpu.memory_space<vmem>>, vector<1x8x128xf32>,
    %c1_i32 = arith.constant 1 : i32
    %cst_18 = arith.constant dense<0.000000e+00> : vector<8x128xf32>
    %24 = tpu.matmul %19, %12, %cst_18 {dimension_numbers = #tpu.dot_dimension_numbers<[1], [0], [0], [1], [0, 0, 1, 1], [], []>} : vector<8x128xf32>, vector<128x128xf32>, vector<8x128xf32> -> vector<8x128xf32>
    %25 = arith.index_cast %c1_i32 : i32 to index
    %c0_19 = arith.constant 0 : index
    %c0_20 = arith.constant 0 : index
    %26 = vector.load %arg9[%25, %c0_19, %c0_20] : memref<8x8x128xf32, #tpu.memory_space<vmem>>, vector<1x8x128xf32>
    %27 = vector.shape_cast %26 : vector<1x8x128xf32> to vector<8x128xf32>
    %28 = arith.addf %24, %27 : vector<8x128xf32>
    %29 = math.tanh %28 : vector<8x128xf32>
    %30 = arith.index_cast %c1_i32 : i32 to index
    %c0_21 = arith.constant 0 : index
    %c0_22 = arith.constant 0 : index
    %31 = vector.load %arg9[%30, %c0_21, %c0_22] : memref<8x8x128xf32, #tpu.memory_space<vmem>>, vector<1x8x128xf32>
    %32 = vector.shape_cast %31 : vector<1x8x128xf32> to vector<8x128xf32>
    %33 = vector.shape_cast %29 : vector<8x128xf32> to vector<1x8x128xf32>
    tpu.vector_store %arg9[%30, %c0_21, %c0_22], %33 {strides = array<i32>} : memref<8x8x128xf32, #tpu.memory_space<vmem>>, vector<1x8x128xf32>,
    %c2_i32 = arith.constant 2 : i32
    %cst_23 = arith.constant dense<0.000000e+00> : vector<8x128xf32>
    %34 = tpu.matmul %29, %12, %cst_23 {dimension_numbers = #tpu.dot_dimension_numbers<[1], [0], [0], [1], [0, 0, 1, 1], [], []>} : vector<8x128xf32>, vector<128x128xf32>, vector<8x128xf32> -> vector<8x128xf32>
    %35 = arith.index_cast %c2_i32 : i32 to index
    %c0_24 = arith.constant 0 : index
    %c0_25 = arith.constant 0 : index
    %36 = vector.load %arg9[%35, %c0_24, %c0_25] : memref<8x8x128xf32, #tpu.memory_space<vmem>>, vector<1x8x128xf32>
    %37 = vector.shape_cast %36 : vector<1x8x128xf32> to vector<8x128xf32>
    %38 = arith.addf %34, %37 : vector<8x128xf32>
    %39 = math.tanh %38 : vector<8x128xf32>
    %40 = arith.index_cast %c2_i32 : i32 to index
    %c0_26 = arith.constant 0 : index
    %c0_27 = arith.constant 0 : index
    %41 = vector.load %arg9[%40, %c0_26, %c0_27] : memref<8x8x128xf32, #tpu.memory_space<vmem>>, vector<1x8x128xf32>
    %42 = vector.shape_cast %41 : vector<1x8x128xf32> to vector<8x128xf32>
    %43 = vector.shape_cast %39 : vector<8x128xf32> to vector<1x8x128xf32>
    tpu.vector_store %arg9[%40, %c0_26, %c0_27], %43 {strides = array<i32>} : memref<8x8x128xf32, #tpu.memory_space<vmem>>, vector<1x8x128xf32>,
    %c3_i32 = arith.constant 3 : i32
    %cst_28 = arith.constant dense<0.000000e+00> : vector<8x128xf32>
    %44 = tpu.matmul %39, %12, %cst_28 {dimension_numbers = #tpu.dot_dimension_numbers<[1], [0], [0], [1], [0, 0, 1, 1], [], []>} : vector<8x128xf32>, vector<128x128xf32>, vector<8x128xf32> -> vector<8x128xf32>
    %45 = arith.index_cast %c3_i32 : i32 to index
    %c0_29 = arith.constant 0 : index
    %c0_30 = arith.constant 0 : index
    %46 = vector.load %arg9[%45, %c0_29, %c0_30] : memref<8x8x128xf32, #tpu.memory_space<vmem>>, vector<1x8x128xf32>
    %47 = vector.shape_cast %46 : vector<1x8x128xf32> to vector<8x128xf32>
    %48 = arith.addf %44, %47 : vector<8x128xf32>
    %49 = math.tanh %48 : vector<8x128xf32>
    %50 = arith.index_cast %c3_i32 : i32 to index
    %c0_31 = arith.constant 0 : index
    %c0_32 = arith.constant 0 : index
    %51 = vector.load %arg9[%50, %c0_31, %c0_32] : memref<8x8x128xf32, #tpu.memory_space<vmem>>, vector<1x8x128xf32>
    %52 = vector.shape_cast %51 : vector<1x8x128xf32> to vector<8x128xf32>
    %53 = vector.shape_cast %49 : vector<8x128xf32> to vector<1x8x128xf32>
    tpu.vector_store %arg9[%50, %c0_31, %c0_32], %53 {strides = array<i32>} : memref<8x8x128xf32, #tpu.memory_space<vmem>>, vector<1x8x128xf32>,
    %c4_i32 = arith.constant 4 : i32
    %cst_33 = arith.constant dense<0.000000e+00> : vector<8x128xf32>
    %54 = tpu.matmul %49, %12, %cst_33 {dimension_numbers = #tpu.dot_dimension_numbers<[1], [0], [0], [1], [0, 0, 1, 1], [], []>} : vector<8x128xf32>, vector<128x128xf32>, vector<8x128xf32> -> vector<8x128xf32>
    %55 = arith.index_cast %c4_i32 : i32 to index
    %c0_34 = arith.constant 0 : index
    %c0_35 = arith.constant 0 : index
    %56 = vector.load %arg9[%55, %c0_34, %c0_35] : memref<8x8x128xf32, #tpu.memory_space<vmem>>, vector<1x8x128xf32>
    %57 = vector.shape_cast %56 : vector<1x8x128xf32> to vector<8x128xf32>
    %58 = arith.addf %54, %57 : vector<8x128xf32>
    %59 = math.tanh %58 : vector<8x128xf32>
    %60 = arith.index_cast %c4_i32 : i32 to index
    %c0_36 = arith.constant 0 : index
    %c0_37 = arith.constant 0 : index
    %61 = vector.load %arg9[%60, %c0_36, %c0_37] : memref<8x8x128xf32, #tpu.memory_space<vmem>>, vector<1x8x128xf32>
    %62 = vector.shape_cast %61 : vector<1x8x128xf32> to vector<8x128xf32>
    %63 = vector.shape_cast %59 : vector<8x128xf32> to vector<1x8x128xf32>
    tpu.vector_store %arg9[%60, %c0_36, %c0_37], %63 {strides = array<i32>} : memref<8x8x128xf32, #tpu.memory_space<vmem>>, vector<1x8x128xf32>,
    %c5_i32 = arith.constant 5 : i32
    %cst_38 = arith.constant dense<0.000000e+00> : vector<8x128xf32>
    %64 = tpu.matmul %59, %12, %cst_38 {dimension_numbers = #tpu.dot_dimension_numbers<[1], [0], [0], [1], [0, 0, 1, 1], [], []>} : vector<8x128xf32>, vector<128x128xf32>, vector<8x128xf32> -> vector<8x128xf32>
    %65 = arith.index_cast %c5_i32 : i32 to index
    %c0_39 = arith.constant 0 : index
    %c0_40 = arith.constant 0 : index
    %66 = vector.load %arg9[%65, %c0_39, %c0_40] : memref<8x8x128xf32, #tpu.memory_space<vmem>>, vector<1x8x128xf32>
    %67 = vector.shape_cast %66 : vector<1x8x128xf32> to vector<8x128xf32>
    %68 = arith.addf %64, %67 : vector<8x128xf32>
    %69 = math.tanh %68 : vector<8x128xf32>
    %70 = arith.index_cast %c5_i32 : i32 to index
    %c0_41 = arith.constant 0 : index
    %c0_42 = arith.constant 0 : index
    %71 = vector.load %arg9[%70, %c0_41, %c0_42] : memref<8x8x128xf32, #tpu.memory_space<vmem>>, vector<1x8x128xf32>
    %72 = vector.shape_cast %71 : vector<1x8x128xf32> to vector<8x128xf32>
    %73 = vector.shape_cast %69 : vector<8x128xf32> to vector<1x8x128xf32>
    tpu.vector_store %arg9[%70, %c0_41, %c0_42], %73 {strides = array<i32>} : memref<8x8x128xf32, #tpu.memory_space<vmem>>, vector<1x8x128xf32>,
    %c6_i32 = arith.constant 6 : i32
    %cst_43 = arith.constant dense<0.000000e+00> : vector<8x128xf32>
    %74 = tpu.matmul %69, %12, %cst_43 {dimension_numbers = #tpu.dot_dimension_numbers<[1], [0], [0], [1], [0, 0, 1, 1], [], []>} : vector<8x128xf32>, vector<128x128xf32>, vector<8x128xf32> -> vector<8x128xf32>
    %75 = arith.index_cast %c6_i32 : i32 to index
    %c0_44 = arith.constant 0 : index
    %c0_45 = arith.constant 0 : index
    %76 = vector.load %arg9[%75, %c0_44, %c0_45] : memref<8x8x128xf32, #tpu.memory_space<vmem>>, vector<1x8x128xf32>
    %77 = vector.shape_cast %76 : vector<1x8x128xf32> to vector<8x128xf32>
    %78 = arith.addf %74, %77 : vector<8x128xf32>
    %79 = math.tanh %78 : vector<8x128xf32>
    %80 = arith.index_cast %c6_i32 : i32 to index
    %c0_46 = arith.constant 0 : index
    %c0_47 = arith.constant 0 : index
    %81 = vector.load %arg9[%80, %c0_46, %c0_47] : memref<8x8x128xf32, #tpu.memory_space<vmem>>, vector<1x8x128xf32>
    %82 = vector.shape_cast %81 : vector<1x8x128xf32> to vector<8x128xf32>
    %83 = vector.shape_cast %79 : vector<8x128xf32> to vector<1x8x128xf32>
    tpu.vector_store %arg9[%80, %c0_46, %c0_47], %83 {strides = array<i32>} : memref<8x8x128xf32, #tpu.memory_space<vmem>>, vector<1x8x128xf32>,
    %c7_i32 = arith.constant 7 : i32
    %cst_48 = arith.constant dense<0.000000e+00> : vector<8x128xf32>
    %84 = tpu.matmul %79, %12, %cst_48 {dimension_numbers = #tpu.dot_dimension_numbers<[1], [0], [0], [1], [0, 0, 1, 1], [], []>} : vector<8x128xf32>, vector<128x128xf32>, vector<8x128xf32> -> vector<8x128xf32>
    %85 = arith.index_cast %c7_i32 : i32 to index
    %c0_49 = arith.constant 0 : index
    %c0_50 = arith.constant 0 : index
    %86 = vector.load %arg9[%85, %c0_49, %c0_50] : memref<8x8x128xf32, #tpu.memory_space<vmem>>, vector<1x8x128xf32>
    %87 = vector.shape_cast %86 : vector<1x8x128xf32> to vector<8x128xf32>
    %88 = arith.addf %84, %87 : vector<8x128xf32>
    %89 = math.tanh %88 : vector<8x128xf32>
    %90 = arith.index_cast %c7_i32 : i32 to index
    %c0_51 = arith.constant 0 : index
    %c0_52 = arith.constant 0 : index
    %91 = vector.load %arg9[%90, %c0_51, %c0_52] : memref<8x8x128xf32, #tpu.memory_space<vmem>>, vector<1x8x128xf32>
    %92 = vector.shape_cast %91 : vector<1x8x128xf32> to vector<8x128xf32>
    %93 = vector.shape_cast %89 : vector<8x128xf32> to vector<1x8x128xf32>
    tpu.vector_store %arg9[%90, %c0_51, %c0_52], %93 {strides = array<i32>} : memref<8x8x128xf32, #tpu.memory_space<vmem>>, vector<1x8x128xf32>,
    %c8_i32 = arith.constant 8 : i32
    %c0_53 = arith.constant 0 : index
    %c0_54 = arith.constant 0 : index
    %c0_55 = arith.constant 0 : index
    %94 = vector.load %arg3[%c0_53, %c0_54, %c0_55] : memref<1x128x128xf32, #tpu.memory_space<vmem>>, vector<1x128x128xf32>
    %95 = vector.shape_cast %94 : vector<1x128x128xf32> to vector<128x128xf32>
    %c1 = arith.constant 1 : index
    %c0_56 = arith.constant 0 : index
    %96 = vector.load %arg5[%c1, %c0_56] : memref<2x128xf32, #tpu.memory_space<vmem>>, vector<1x128xf32>
    %97 = vector.shape_cast %96 : vector<1x128xf32> to vector<128xf32>
    %c0_57 = arith.constant 0 : index
    %c0_58 = arith.constant 0 : index
    %c0_59 = arith.constant 0 : index
    %98 = vector.load %arg9[%c0_57, %c0_58, %c0_59] : memref<8x8x128xf32, #tpu.memory_space<vmem>>, vector<8x8x128xf32>
    %99 = vector.shape_cast %98 : vector<8x8x128xf32> to vector<64x128xf32>
    %cst_60 = arith.constant dense<0.000000e+00> : vector<64x128xf32>
    %100 = tpu.matmul %99, %95, %cst_60 {dimension_numbers = #tpu.dot_dimension_numbers<[1], [0], [0], [1], [0, 0, 1, 1], [], []>} : vector<64x128xf32>, vector<128x128xf32>, vector<64x128xf32> -> vector<64x128xf32>
    %101 = vector.shape_cast %97 : vector<128xf32> to vector<1x128xf32>
    %102 = vector.broadcast %101 : vector<1x128xf32> to vector<64x128xf32>
    %103 = arith.addf %100, %102 : vector<64x128xf32>
    %104 = vector.shape_cast %103 : vector<64x128xf32> to vector<8x8x128xf32>
    %c0_61 = arith.constant 0 : index
    %c0_62 = arith.constant 0 : index
    %c0_63 = arith.constant 0 : index
    %105 = vector.load %arg9[%c0_61, %c0_62, %c0_63] : memref<8x8x128xf32, #tpu.memory_space<vmem>>, vector<8x8x128xf32>
    tpu.vector_store %arg9[%c0_61, %c0_62, %c0_63], %104 {strides = array<i32>} : memref<8x8x128xf32, #tpu.memory_space<vmem>>, vector<8x8x128xf32>,
    %c1_64 = arith.constant 1 : index
    %c0_65 = arith.constant 0 : index
    %c0_66 = arith.constant 0 : index
    %106 = vector.load %arg4[%c1_64, %c0_65, %c0_66] : memref<2x128x128xf32, #tpu.memory_space<vmem>>, vector<1x128x128xf32>
    %107 = vector.shape_cast %106 : vector<1x128x128xf32> to vector<128x128xf32>
    %cst_67 = arith.constant 0.000000e+00 : f32
    %108 = vector.broadcast %cst_67 : f32 to vector<8x128xf32>
    %c0_i32_68 = arith.constant 0 : i32
    %cst_69 = arith.constant dense<0.000000e+00> : vector<8x128xf32>
    %109 = tpu.matmul %108, %107, %cst_69 {dimension_numbers = #tpu.dot_dimension_numbers<[1], [0], [0], [1], [0, 0, 1, 1], [], []>} : vector<8x128xf32>, vector<128x128xf32>, vector<8x128xf32> -> vector<8x128xf32>
    %110 = arith.index_cast %c0_i32_68 : i32 to index
    %c0_70 = arith.constant 0 : index
    %c0_71 = arith.constant 0 : index
    %111 = vector.load %arg9[%110, %c0_70, %c0_71] : memref<8x8x128xf32, #tpu.memory_space<vmem>>, vector<1x8x128xf32>
    %112 = vector.shape_cast %111 : vector<1x8x128xf32> to vector<8x128xf32>
    %113 = arith.addf %109, %112 : vector<8x128xf32>
    %114 = math.tanh %113 : vector<8x128xf32>
    %115 = arith.index_cast %c0_i32_68 : i32 to index
    %c0_72 = arith.constant 0 : index
    %c0_73 = arith.constant 0 : index
    %116 = vector.load %arg9[%115, %c0_72, %c0_73] : memref<8x8x128xf32, #tpu.memory_space<vmem>>, vector<1x8x128xf32>
    %117 = vector.shape_cast %116 : vector<1x8x128xf32> to vector<8x128xf32>
    %118 = vector.shape_cast %114 : vector<8x128xf32> to vector<1x8x128xf32>
    tpu.vector_store %arg9[%115, %c0_72, %c0_73], %118 {strides = array<i32>} : memref<8x8x128xf32, #tpu.memory_space<vmem>>, vector<1x8x128xf32>,
    %c1_i32_74 = arith.constant 1 : i32
    %cst_75 = arith.constant dense<0.000000e+00> : vector<8x128xf32>
    %119 = tpu.matmul %114, %107, %cst_75 {dimension_numbers = #tpu.dot_dimension_numbers<[1], [0], [0], [1], [0, 0, 1, 1], [], []>} : vector<8x128xf32>, vector<128x128xf32>, vector<8x128xf32> -> vector<8x128xf32>
    %120 = arith.index_cast %c1_i32_74 : i32 to index
    %c0_76 = arith.constant 0 : index
    %c0_77 = arith.constant 0 : index
    %121 = vector.load %arg9[%120, %c0_76, %c0_77] : memref<8x8x128xf32, #tpu.memory_space<vmem>>, vector<1x8x128xf32>
    %122 = vector.shape_cast %121 : vector<1x8x128xf32> to vector<8x128xf32>
    %123 = arith.addf %119, %122 : vector<8x128xf32>
    %124 = math.tanh %123 : vector<8x128xf32>
    %125 = arith.index_cast %c1_i32_74 : i32 to index
    %c0_78 = arith.constant 0 : index
    %c0_79 = arith.constant 0 : index
    %126 = vector.load %arg9[%125, %c0_78, %c0_79] : memref<8x8x128xf32, #tpu.memory_space<vmem>>, vector<1x8x128xf32>
    %127 = vector.shape_cast %126 : vector<1x8x128xf32> to vector<8x128xf32>
    %128 = vector.shape_cast %124 : vector<8x128xf32> to vector<1x8x128xf32>
    tpu.vector_store %arg9[%125, %c0_78, %c0_79], %128 {strides = array<i32>} : memref<8x8x128xf32, #tpu.memory_space<vmem>>, vector<1x8x128xf32>,
    %c2_i32_80 = arith.constant 2 : i32
    %cst_81 = arith.constant dense<0.000000e+00> : vector<8x128xf32>
    %129 = tpu.matmul %124, %107, %cst_81 {dimension_numbers = #tpu.dot_dimension_numbers<[1], [0], [0], [1], [0, 0, 1, 1], [], []>} : vector<8x128xf32>, vector<128x128xf32>, vector<8x128xf32> -> vector<8x128xf32>
    %130 = arith.index_cast %c2_i32_80 : i32 to index
    %c0_82 = arith.constant 0 : index
    %c0_83 = arith.constant 0 : index
    %131 = vector.load %arg9[%130, %c0_82, %c0_83] : memref<8x8x128xf32, #tpu.memory_space<vmem>>, vector<1x8x128xf32>
    %132 = vector.shape_cast %131 : vector<1x8x128xf32> to vector<8x128xf32>
    %133 = arith.addf %129, %132 : vector<8x128xf32>
    %134 = math.tanh %133 : vector<8x128xf32>
    %135 = arith.index_cast %c2_i32_80 : i32 to index
    %c0_84 = arith.constant 0 : index
    %c0_85 = arith.constant 0 : index
    %136 = vector.load %arg9[%135, %c0_84, %c0_85] : memref<8x8x128xf32, #tpu.memory_space<vmem>>, vector<1x8x128xf32>
    %137 = vector.shape_cast %136 : vector<1x8x128xf32> to vector<8x128xf32>
    %138 = vector.shape_cast %134 : vector<8x128xf32> to vector<1x8x128xf32>
    tpu.vector_store %arg9[%135, %c0_84, %c0_85], %138 {strides = array<i32>} : memref<8x8x128xf32, #tpu.memory_space<vmem>>, vector<1x8x128xf32>,
    %c3_i32_86 = arith.constant 3 : i32
    %cst_87 = arith.constant dense<0.000000e+00> : vector<8x128xf32>
    %139 = tpu.matmul %134, %107, %cst_87 {dimension_numbers = #tpu.dot_dimension_numbers<[1], [0], [0], [1], [0, 0, 1, 1], [], []>} : vector<8x128xf32>, vector<128x128xf32>, vector<8x128xf32> -> vector<8x128xf32>
    %140 = arith.index_cast %c3_i32_86 : i32 to index
    %c0_88 = arith.constant 0 : index
    %c0_89 = arith.constant 0 : index
    %141 = vector.load %arg9[%140, %c0_88, %c0_89] : memref<8x8x128xf32, #tpu.memory_space<vmem>>, vector<1x8x128xf32>
    %142 = vector.shape_cast %141 : vector<1x8x128xf32> to vector<8x128xf32>
    %143 = arith.addf %139, %142 : vector<8x128xf32>
    %144 = math.tanh %143 : vector<8x128xf32>
    %145 = arith.index_cast %c3_i32_86 : i32 to index
    %c0_90 = arith.constant 0 : index
    %c0_91 = arith.constant 0 : index
    %146 = vector.load %arg9[%145, %c0_90, %c0_91] : memref<8x8x128xf32, #tpu.memory_space<vmem>>, vector<1x8x128xf32>
    %147 = vector.shape_cast %146 : vector<1x8x128xf32> to vector<8x128xf32>
    %148 = vector.shape_cast %144 : vector<8x128xf32> to vector<1x8x128xf32>
    tpu.vector_store %arg9[%145, %c0_90, %c0_91], %148 {strides = array<i32>} : memref<8x8x128xf32, #tpu.memory_space<vmem>>, vector<1x8x128xf32>,
    %c4_i32_92 = arith.constant 4 : i32
    %cst_93 = arith.constant dense<0.000000e+00> : vector<8x128xf32>
    %149 = tpu.matmul %144, %107, %cst_93 {dimension_numbers = #tpu.dot_dimension_numbers<[1], [0], [0], [1], [0, 0, 1, 1], [], []>} : vector<8x128xf32>, vector<128x128xf32>, vector<8x128xf32> -> vector<8x128xf32>
    %150 = arith.index_cast %c4_i32_92 : i32 to index
    %c0_94 = arith.constant 0 : index
    %c0_95 = arith.constant 0 : index
    %151 = vector.load %arg9[%150, %c0_94, %c0_95] : memref<8x8x128xf32, #tpu.memory_space<vmem>>, vector<1x8x128xf32>
    %152 = vector.shape_cast %151 : vector<1x8x128xf32> to vector<8x128xf32>
    %153 = arith.addf %149, %152 : vector<8x128xf32>
    %154 = math.tanh %153 : vector<8x128xf32>
    %155 = arith.index_cast %c4_i32_92 : i32 to index
    %c0_96 = arith.constant 0 : index
    %c0_97 = arith.constant 0 : index
    %156 = vector.load %arg9[%155, %c0_96, %c0_97] : memref<8x8x128xf32, #tpu.memory_space<vmem>>, vector<1x8x128xf32>
    %157 = vector.shape_cast %156 : vector<1x8x128xf32> to vector<8x128xf32>
    %158 = vector.shape_cast %154 : vector<8x128xf32> to vector<1x8x128xf32>
    tpu.vector_store %arg9[%155, %c0_96, %c0_97], %158 {strides = array<i32>} : memref<8x8x128xf32, #tpu.memory_space<vmem>>, vector<1x8x128xf32>,
    %c5_i32_98 = arith.constant 5 : i32
    %cst_99 = arith.constant dense<0.000000e+00> : vector<8x128xf32>
    %159 = tpu.matmul %154, %107, %cst_99 {dimension_numbers = #tpu.dot_dimension_numbers<[1], [0], [0], [1], [0, 0, 1, 1], [], []>} : vector<8x128xf32>, vector<128x128xf32>, vector<8x128xf32> -> vector<8x128xf32>
    %160 = arith.index_cast %c5_i32_98 : i32 to index
    %c0_100 = arith.constant 0 : index
    %c0_101 = arith.constant 0 : index
    %161 = vector.load %arg9[%160, %c0_100, %c0_101] : memref<8x8x128xf32, #tpu.memory_space<vmem>>, vector<1x8x128xf32>
    %162 = vector.shape_cast %161 : vector<1x8x128xf32> to vector<8x128xf32>
    %163 = arith.addf %159, %162 : vector<8x128xf32>
    %164 = math.tanh %163 : vector<8x128xf32>
    %165 = arith.index_cast %c5_i32_98 : i32 to index
    %c0_102 = arith.constant 0 : index
    %c0_103 = arith.constant 0 : index
    %166 = vector.load %arg9[%165, %c0_102, %c0_103] : memref<8x8x128xf32, #tpu.memory_space<vmem>>, vector<1x8x128xf32>
    %167 = vector.shape_cast %166 : vector<1x8x128xf32> to vector<8x128xf32>
    %168 = vector.shape_cast %164 : vector<8x128xf32> to vector<1x8x128xf32>
    tpu.vector_store %arg9[%165, %c0_102, %c0_103], %168 {strides = array<i32>} : memref<8x8x128xf32, #tpu.memory_space<vmem>>, vector<1x8x128xf32>,
    %c6_i32_104 = arith.constant 6 : i32
    %cst_105 = arith.constant dense<0.000000e+00> : vector<8x128xf32>
    %169 = tpu.matmul %164, %107, %cst_105 {dimension_numbers = #tpu.dot_dimension_numbers<[1], [0], [0], [1], [0, 0, 1, 1], [], []>} : vector<8x128xf32>, vector<128x128xf32>, vector<8x128xf32> -> vector<8x128xf32>
    %170 = arith.index_cast %c6_i32_104 : i32 to index
    %c0_106 = arith.constant 0 : index
    %c0_107 = arith.constant 0 : index
    %171 = vector.load %arg9[%170, %c0_106, %c0_107] : memref<8x8x128xf32, #tpu.memory_space<vmem>>, vector<1x8x128xf32>
    %172 = vector.shape_cast %171 : vector<1x8x128xf32> to vector<8x128xf32>
    %173 = arith.addf %169, %172 : vector<8x128xf32>
    %174 = math.tanh %173 : vector<8x128xf32>
    %175 = arith.index_cast %c6_i32_104 : i32 to index
    %c0_108 = arith.constant 0 : index
    %c0_109 = arith.constant 0 : index
    %176 = vector.load %arg9[%175, %c0_108, %c0_109] : memref<8x8x128xf32, #tpu.memory_space<vmem>>, vector<1x8x128xf32>
    %177 = vector.shape_cast %176 : vector<1x8x128xf32> to vector<8x128xf32>
    %178 = vector.shape_cast %174 : vector<8x128xf32> to vector<1x8x128xf32>
    tpu.vector_store %arg9[%175, %c0_108, %c0_109], %178 {strides = array<i32>} : memref<8x8x128xf32, #tpu.memory_space<vmem>>, vector<1x8x128xf32>,
    %c7_i32_110 = arith.constant 7 : i32
    %cst_111 = arith.constant dense<0.000000e+00> : vector<8x128xf32>
    %179 = tpu.matmul %174, %107, %cst_111 {dimension_numbers = #tpu.dot_dimension_numbers<[1], [0], [0], [1], [0, 0, 1, 1], [], []>} : vector<8x128xf32>, vector<128x128xf32>, vector<8x128xf32> -> vector<8x128xf32>
    %180 = arith.index_cast %c7_i32_110 : i32 to index
    %c0_112 = arith.constant 0 : index
    %c0_113 = arith.constant 0 : index
    %181 = vector.load %arg9[%180, %c0_112, %c0_113] : memref<8x8x128xf32, #tpu.memory_space<vmem>>, vector<1x8x128xf32>
    %182 = vector.shape_cast %181 : vector<1x8x128xf32> to vector<8x128xf32>
    %183 = arith.addf %179, %182 : vector<8x128xf32>
    %184 = math.tanh %183 : vector<8x128xf32>
    %185 = arith.index_cast %c7_i32_110 : i32 to index
    %c0_114 = arith.constant 0 : index
    %c0_115 = arith.constant 0 : index
    %186 = vector.load %arg9[%185, %c0_114, %c0_115] : memref<8x8x128xf32, #tpu.memory_space<vmem>>, vector<1x8x128xf32>
    %187 = vector.shape_cast %186 : vector<1x8x128xf32> to vector<8x128xf32>
    %188 = vector.shape_cast %184 : vector<8x128xf32> to vector<1x8x128xf32>
    tpu.vector_store %arg9[%185, %c0_114, %c0_115], %188 {strides = array<i32>} : memref<8x8x128xf32, #tpu.memory_space<vmem>>, vector<1x8x128xf32>,
    %c8_i32_116 = arith.constant 8 : i32
    %c0_117 = arith.constant 0 : index
    %c0_118 = arith.constant 0 : index
    %189 = vector.load %arg6[%c0_117, %c0_118] : memref<128x128xf32, #tpu.memory_space<vmem>>, vector<128x128xf32>
    %cst_119 = arith.constant dense<0.000000e+00> : vector<8x128xf32>
    %190 = tpu.matmul %184, %189, %cst_119 {dimension_numbers = #tpu.dot_dimension_numbers<[1], [0], [0], [1], [0, 0, 1, 1], [], []>} : vector<8x128xf32>, vector<128x128xf32>, vector<8x128xf32> -> vector<8x128xf32>
    %c0_120 = arith.constant 0 : index
    %c0_121 = arith.constant 0 : index
    %191 = vector.load %arg7[%c0_120, %c0_121] : memref<1x128xf32, #tpu.memory_space<vmem>>, vector<1x128xf32>
    %192 = vector.shape_cast %191 : vector<1x128xf32> to vector<128xf32>
    %193 = vector.shape_cast %192 : vector<128xf32> to vector<1x128xf32>
    %194 = vector.broadcast %193 : vector<1x128xf32> to vector<8x128xf32>
    %195 = arith.addf %190, %194 : vector<8x128xf32>
    %cst_122 = arith.constant dense<0xFF800000> : vector<8xf32>
    %196 = vector.multi_reduction <maximumf>, %195, %cst_122 [1] : vector<8x128xf32> to vector<8xf32>
    %197 = vector.shape_cast %196 : vector<8xf32> to vector<8x1xf32>
    %198 = vector.broadcast %197 : vector<8x1xf32> to vector<8x128xf32>
    %199 = arith.subf %195, %198 : vector<8x128xf32>
    %200 = math.exp %199 : vector<8x128xf32>
    %cst_123 = arith.constant dense<0.000000e+00> : vector<8xf32>
    %201 = vector.multi_reduction <add>, %200, %cst_123 [1] : vector<8x128xf32> to vector<8xf32>
    %202 = vector.shape_cast %201 : vector<8xf32> to vector<8x1xf32>
    %203 = math.log %202 : vector<8x1xf32>
    %204 = vector.broadcast %203 : vector<8x1xf32> to vector<8x128xf32>
    %205 = arith.subf %199, %204 : vector<8x128xf32>
    %c0_124 = arith.constant 0 : index
    %c0_125 = arith.constant 0 : index
    %206 = vector.load %arg8[%c0_124, %c0_125] : memref<8x128xf32, #tpu.memory_space<vmem>>, vector<8x128xf32>
    tpu.vector_store %arg8[%c0_124, %c0_125], %205 {strides = array<i32>} : memref<8x128xf32, #tpu.memory_space<vmem>>, vector<8x128xf32>,
    return
  }
  func.func @transform_0(%arg0: i32) -> (i32, i32, i32) {
    %c0_i32 = arith.constant 0 : i32
    %c0_i32_0 = arith.constant 0 : i32
    %c0_i32_1 = arith.constant 0 : i32
    return %c0_i32, %arg0, %c0_i32_0 : i32, i32, i32
  }
  func.func @transform_1(%arg0: i32) -> (i32, i32) {
    %c0_i32 = arith.constant 0 : i32
    %c0_i32_0 = arith.constant 0 : i32
    %c0_i32_1 = arith.constant 0 : i32
    return %c0_i32, %c0_i32_0 : i32, i32
  }
  func.func @transform_2(%arg0: i32) -> (i32, i32, i32) {
    %c0_i32 = arith.constant 0 : i32
    %c0_i32_0 = arith.constant 0 : i32
    %c0_i32_1 = arith.constant 0 : i32
    %c0_i32_2 = arith.constant 0 : i32
    return %c0_i32, %c0_i32_0, %c0_i32_1 : i32, i32, i32
  }
  func.func @transform_3(%arg0: i32) -> (i32, i32, i32) {
    %c0_i32 = arith.constant 0 : i32
    %c0_i32_0 = arith.constant 0 : i32
    %c0_i32_1 = arith.constant 0 : i32
    %c0_i32_2 = arith.constant 0 : i32
    return %c0_i32, %c0_i32_0, %c0_i32_1 : i32, i32, i32
  }
  func.func @transform_4(%arg0: i32) -> (i32, i32) {
    %c0_i32 = arith.constant 0 : i32
    %c0_i32_0 = arith.constant 0 : i32
    %c0_i32_1 = arith.constant 0 : i32
    return %c0_i32, %c0_i32_0 : i32, i32
  }
  func.func @transform_5(%arg0: i32) -> (i32, i32) {
    %c0_i32 = arith.constant 0 : i32
    %c0_i32_0 = arith.constant 0 : i32
    %c0_i32_1 = arith.constant 0 : i32
    return %c0_i32, %c0_i32_0 : i32, i32
  }
  func.func @transform_6(%arg0: i32) -> (i32, i32) {
    %c0_i32 = arith.constant 0 : i32
    %c0_i32_0 = arith.constant 0 : i32
    %c0_i32_1 = arith.constant 0 : i32
    return %c0_i32, %c0_i32_0 : i32, i32
  }
  func.func @transform_7(%arg0: i32) -> (i32, i32) {
    %c0_i32 = arith.constant 0 : i32
    %c0_i32_0 = arith.constant 0 : i32
    return %arg0, %c0_i32 : i32, i32
  }
}

</mosaic_0001>

<llo_original>
// kernel: tpu_custom_call.1
$region0: #{tpu_custom_call.1}
  #allocation0 [shape = 'u32[]', space=smem, size = 0x4, offset = 0x4, fixed_abs, tag = 'smem constant byte address 0x4 - core index']
  #allocation1 [shape = 'u32[144,128]{1,0:T(1,128)}', space=vmem, size = 0x12000, scoped, tag = 'internal scratch']
  #allocation2 [shape = 'f32[8,8,128]{2,1,0:T(8,128)}', space=vmem, size = 0x8000, scoped, tag = 'scratch operand']
  %s0 = inlined_call_operand.hbm [shape: f32[8,8,128], index: 0, kind: input, shape index: {}]
  %s1 = inlined_call_operand.hbm [shape: f32[128,128], index: 1, kind: input, shape index: {}]
  %s2 = inlined_call_operand.hbm [shape: f32[1,128,128], index: 2, kind: input, shape index: {}]
  %s3 = inlined_call_operand.hbm [shape: f32[2,128,128], index: 3, kind: input, shape index: {}]
  %s4 = inlined_call_operand.vmem [shape: f32[2,128], index: 4, kind: input, shape index: {}]
  %s5 = inlined_call_operand.hbm [shape: f32[128,128], index: 5, kind: input, shape index: {}]
  %s6 = inlined_call_operand.vmem [shape: f32[1,128], index: 6, kind: input, shape index: {}]
  %s7 = inlined_call_operand.hbm [shape: f32[8,128], index: 7, kind: output, shape index: {}]
  %s8 = sld [smem:[#allocation0]]
  $region58: #{tpu_custom_call.1} parent=0
    _
  %s10 = ssub.s32 1, %s8
  %s11 = scalar_select 0, %s10, %s8
  $region1: #{tpu_custom_call.1} parent=0
    #allocation3 [shape = 'u8[32768]{0}', space=vmem, size = 0x8000, scoped, tag = 'input window, operand 0, single buffered']
    #allocation4 [shape = 's32[1]{0}', space=sflag, size = 0x4, scoped, tag = 'scoped memory for tpu_custom_call.1']
    #allocation5 [shape = 's32[1]{0}', space=sflag, size = 0x4, scoped, tag = 'scoped memory for tpu_custom_call.1']
    #allocation6 [shape = 'u8[65536]{0}', space=vmem, size = 0x10000, scoped, tag = 'input window, operand 1, single buffered']
    #allocation7 [shape = 's32[1]{0}', space=sflag, size = 0x4, scoped, tag = 'scoped memory for tpu_custom_call.1']
    #allocation8 [shape = 'u8[65536]{0}', space=vmem, size = 0x10000, scoped, tag = 'input window, operand 2, single buffered']
    #allocation9 [shape = 'u8[131072]{0}', space=vmem, size = 0x20000, scoped, tag = 'input window, operand 3, single buffered']
    #allocation10 [shape = 's32[1]{0}', space=sflag, size = 0x4, scoped, tag = 'scoped memory for tpu_custom_call.1']
    #allocation11 [shape = 'u8[65536]{0}', space=vmem, size = 0x10000, scoped, tag = 'input window, operand 5, single buffered']
    #allocation12 [shape = 'u8[4096]{0}', space=vmem, size = 0x1000, scoped, tag = 'output window, operand 0, single buffered']
    %12 = vsyncpa [#allocation4], 0
    %13 = vsyncpa [#allocation7], 0
    %14 = vsyncpa [#allocation10], 0
    %15 = vsyncpa [#allocation5], 0
    // Predicated region
    $region2: #{tpu_custom_call.1} parent=1 // pred_check
      _
    $region3: #{tpu_custom_call.1} parent=1 // pred_check_branch
      %17 = sbr.rel (0) target = $region5
    $region4: #{tpu_custom_call.1} parent=1 // pred_region
      %s19 = ssub.s32 1024, 1024
      %20 = vsyncadd [#allocation4], %s19
      %s21 = sshll.u32 [#allocation3], 4
      %s22 = int_to_ptr.vmem [resolvable:$true] %s21
      %27 = dma.hbm_to_vmem [thread:$0]  %s0, 1024, %s22, [#allocation4], 128, 128, 8
    $region5: #{tpu_custom_call.1} parent=1 // pred_fallthru
      _
    // Predicated region
    $region6: #{tpu_custom_call.1} parent=1 // pred_check
      _
    $region7: #{tpu_custom_call.1} parent=1 // pred_check_branch
      %29 = sbr.rel (0) target = $region9
    $region8: #{tpu_custom_call.1} parent=1 // pred_region
      %s31 = ssub.s32 2048, 2048
      %32 = vsyncadd [#allocation7], %s31
      %s33 = sshll.u32 [#allocation6], 4
      %s34 = int_to_ptr.vmem [resolvable:$true] %s33
      %39 = dma.hbm_to_vmem [thread:$0]  %s1, 2048, %s34, [#allocation7], 128, 128, 8
    $region9: #{tpu_custom_call.1} parent=1 // pred_fallthru
      _
    // Predicated region
    $region10: #{tpu_custom_call.1} parent=1 // pred_check
      _
    $region11: #{tpu_custom_call.1} parent=1 // pred_check_branch
      %41 = sbr.rel (0) target = $region13
    $region12: #{tpu_custom_call.1} parent=1 // pred_region
      %s43 = ssub.s32 2048, 2048
      %44 = vsyncadd [#allocation7], %s43
      %s45 = sshll.u32 [#allocation8], 4
      %s46 = int_to_ptr.vmem [resolvable:$true] %s45
      %51 = dma.hbm_to_vmem [thread:$0]  %s2, 2048, %s46, [#allocation7], 128, 128, 8
    $region13: #{tpu_custom_call.1} parent=1 // pred_fallthru
      _
    // Predicated region
    $region14: #{tpu_custom_call.1} parent=1 // pred_check
      _
    $region15: #{tpu_custom_call.1} parent=1 // pred_check_branch
      %53 = sbr.rel (0) target = $region17
    $region16: #{tpu_custom_call.1} parent=1 // pred_region
      %s55 = ssub.s32 4096, 4096
      %56 = vsyncadd [#allocation10], %s55
      %s57 = sshll.u32 [#allocation9], 4
      %s58 = int_to_ptr.vmem [resolvable:$true] %s57
      %63 = dma.hbm_to_vmem [thread:$0]  %s3, 4096, %s58, [#allocation10], 128, 128, 8
    $region17: #{tpu_custom_call.1} parent=1 // pred_fallthru
      _
    // Predicated region
    $region18: #{tpu_custom_call.1} parent=1 // pred_check
      _
    $region19: #{tpu_custom_call.1} parent=1 // pred_check_branch
      %65 = sbr.rel (0) target = $region21
    $region20: #{tpu_custom_call.1} parent=1 // pred_region
      _
    $region21: #{tpu_custom_call.1} parent=1 // pred_fallthru
      _
    // Predicated region
    $region22: #{tpu_custom_call.1} parent=1 // pred_check
      _
    $region23: #{tpu_custom_call.1} parent=1 // pred_check_branch
      %67 = sbr.rel (0) target = $region25
    $region24: #{tpu_custom_call.1} parent=1 // pred_region
      %s69 = ssub.s32 2048, 2048
      %70 = vsyncadd [#allocation10], %s69
      %s71 = sshll.u32 [#allocation11], 4
      %s72 = int_to_ptr.vmem [resolvable:$true] %s71
      %77 = dma.hbm_to_vmem [thread:$0]  %s5, 2048, %s72, [#allocation10], 128, 128, 8
    $region25: #{tpu_custom_call.1} parent=1 // pred_fallthru
      _
    // Predicated region
    $region26: #{tpu_custom_call.1} parent=1 // pred_check
      _
    $region27: #{tpu_custom_call.1} parent=1 // pred_check_branch
      %79 = sbr.rel (0) target = $region29
    $region28: #{tpu_custom_call.1} parent=1 // pred_region
      _
    $region29: #{tpu_custom_call.1} parent=1 // pred_fallthru
      _
    // Predicated region
    $region30: #{tpu_custom_call.1} parent=1 // pred_check
      _
    $region31: #{tpu_custom_call.1} parent=1 // pred_check_branch
      %81 = sbr.rel (0) target = $region33
    $region32: #{tpu_custom_call.1} parent=1 // pred_region
      %82 = dma.done [#allocation4], 1024
    $region33: #{tpu_custom_call.1} parent=1 // pred_fallthru
      _
    // Predicated region
    $region34: #{tpu_custom_call.1} parent=1 // pred_check
      _
    $region35: #{tpu_custom_call.1} parent=1 // pred_check_branch
      %84 = sbr.rel (0) target = $region37
    $region36: #{tpu_custom_call.1} parent=1 // pred_region
      %85 = dma.done [#allocation7], 2048
    $region37: #{tpu_custom_call.1} parent=1 // pred_fallthru
      _
    // Predicated region
    $region38: #{tpu_custom_call.1} parent=1 // pred_check
      _
    $region39: #{tpu_custom_call.1} parent=1 // pred_check_branch
      %87 = sbr.rel (0) target = $region41
    $region40: #{tpu_custom_call.1} parent=1 // pred_region
      %88 = dma.done [#allocation7], 2048
    $region41: #{tpu_custom_call.1} parent=1 // pred_fallthru
      _
    // Predicated region
    $region42: #{tpu_custom_call.1} parent=1 // pred_check
      _
    $region43: #{tpu_custom_call.1} parent=1 // pred_check_branch
      %90 = sbr.rel (0) target = $region45
    $region44: #{tpu_custom_call.1} parent=1 // pred_region
      %91 = dma.done [#allocation10], 4096
    $region45: #{tpu_custom_call.1} parent=1 // pred_fallthru
      _
    // Predicated region
    $region46: #{tpu_custom_call.1} parent=1 // pred_check
      _
    $region47: #{tpu_custom_call.1} parent=1 // pred_check_branch
      %93 = sbr.rel (0) target = $region49
    $region48: #{tpu_custom_call.1} parent=1 // pred_region
      %94 = dma.done [#allocation10], 2048
    $region49: #{tpu_custom_call.1} parent=1 // pred_fallthru
      _
    %v95 = vld [vmem:[#allocation6] sm:$0xff]
    %v96 = vld [vmem:[#allocation6 + $0x8] sm:$0xff]
    %v97 = vld [vmem:[#allocation6 + $0x10] sm:$0xff]
    %v98 = vld [vmem:[#allocation6 + $0x18] sm:$0xff]
    %v99 = vld [vmem:[#allocation6 + $0x20] sm:$0xff]
    %v100 = vld [vmem:[#allocation6 + $0x28] sm:$0xff]
    %v101 = vld [vmem:[#allocation6 + $0x30] sm:$0xff]
    %v102 = vld [vmem:[#allocation6 + $0x38] sm:$0xff]
    %v103 = vld [vmem:[#allocation6 + $0x40] sm:$0xff]
    %v104 = vld [vmem:[#allocation6 + $0x48] sm:$0xff]
    %v105 = vld [vmem:[#allocation6 + $0x50] sm:$0xff]
    %v106 = vld [vmem:[#allocation6 + $0x58] sm:$0xff]
    %v107 = vld [vmem:[#allocation6 + $0x60] sm:$0xff]
    %v108 = vld [vmem:[#allocation6 + $0x68] sm:$0xff]
    %v109 = vld [vmem:[#allocation6 + $0x70] sm:$0xff]
    %v110 = vld [vmem:[#allocation6 + $0x78] sm:$0xff]
    %v111 = vld [vmem:[%s4] sm:$0x1]
    %v112 = vld [vmem:[#allocation3] sm:$0xff]
    %v113 = vld [vmem:[#allocation3 + $0x8] sm:$0xff]
    %v114 = vld [vmem:[#allocation3 + $0x10] sm:$0xff]
    %v115 = vld [vmem:[#allocation3 + $0x18] sm:$0xff]
    %v116 = vld [vmem:[#allocation3 + $0x20] sm:$0xff]
    %v117 = vld [vmem:[#allocation3 + $0x28] sm:$0xff]
    %v118 = vld [vmem:[#allocation3 + $0x30] sm:$0xff]
    %v119 = vld [vmem:[#allocation3 + $0x38] sm:$0xff]
    %v120 = vlaneseq
    %v121 = vshrl.u32 %v120, 7
    %v122 = vsub.s32 0, %v121
    %v123 = vrot.slane %v111, %v122
    %124 = vmatprep.subr.mxu0 0.0
    %125 = vmatpush1.msra.mxu0 %v110
    %126 = vmatprep.subr.mxu0 0.0
    %127 = vmatpush1.msra.mxu0 %v109
    %128 = vmatprep.subr.mxu0 0.0
    %129 = vmatpush1.msra.mxu0 %v108
    %130 = vmatprep.subr.mxu0 0.0
    %131 = vmatpush1.msra.mxu0 %v107
    %132 = vmatprep.subr.mxu0 0.0
    %133 = vmatpush1.msra.mxu0 %v106
    %134 = vmatprep.subr.mxu0 0.0
    %135 = vmatpush1.msra.mxu0 %v105
    %136 = vmatprep.subr.mxu0 0.0
    %137 = vmatpush1.msra.mxu0 %v104
    %138 = vmatprep.subr.mxu0 0.0
    %139 = vmatpush1.msra.mxu0 %v103
    %140 = vmatprep.subr.mxu0 0.0
    %141 = vmatpush1.msra.mxu0 %v102
    %142 = vmatprep.subr.mxu0 0.0
    %143 = vmatpush1.msra.mxu0 %v101
    %144 = vmatprep.subr.mxu0 0.0
    %145 = vmatpush1.msra.mxu0 %v100
    %146 = vmatprep.subr.mxu0 0.0
    %147 = vmatpush1.msra.mxu0 %v99
    %148 = vmatprep.subr.mxu0 0.0
    %149 = vmatpush1.msra.mxu0 %v98
    %150 = vmatprep.subr.mxu0 0.0
    %151 = vmatpush1.msra.mxu0 %v97
    %152 = vmatprep.subr.mxu0 0.0
    %153 = vmatpush1.msra.mxu0 %v96
    %154 = vmatprep.subr.mxu0 0.0
    %155 = vmatpush1.msra.mxu0 %v95
    %156 = vmatprep.subr.mxu0 0.0
    %157 = vmatpush2.msra.mxu0 0.0
    %158 = vmatprep.subr.mxu0 0.0
    %159 = vmatpush2.msra.mxu0 0.0
    %160 = vmatprep.subr.mxu0 0.0
    %161 = vmatpush2.msra.mxu0 0.0
    %162 = vmatprep.subr.mxu0 0.0
    %163 = vmatpush2.msra.mxu0 0.0
    %164 = vmatprep.subr.mxu0 0.0
    %165 = vmatpush2.msra.mxu0 0.0
    %166 = vmatprep.subr.mxu0 0.0
    %167 = vmatpush2.msra.mxu0 0.0
    %168 = vmatprep.subr.mxu0 0.0
    %169 = vmatpush2.msra.mxu0 0.0
    %170 = vmatprep.subr.mxu0 0.0
    %171 = vmatpush2.msra.mxu0 0.0
    %172 = vmatprep.subr.mxu0 0.0
    %173 = vmatpush2.msra.mxu0 0.0
    %174 = vmatprep.subr.mxu0 0.0
    %175 = vmatpush2.msra.mxu0 0.0
    %176 = vmatprep.subr.mxu0 0.0
    %177 = vmatpush2.msra.mxu0 0.0
    %178 = vmatprep.subr.mxu0 0.0
    %179 = vmatpush2.msra.mxu0 0.0
    %180 = vmatprep.subr.mxu0 0.0
    %181 = vmatpush2.msra.mxu0 0.0
    %182 = vmatprep.subr.mxu0 0.0
    %183 = vmatpush2.msra.mxu0 0.0
    %184 = vmatprep.subr.mxu0 0.0
    %185 = vmatpush2.msra.mxu0 0.0
    %186 = vmatprep.subr.mxu0 0.0
    %187 = vmatpush2.msra.mxu0 0.0
    %188 = vmatprep.mubr.f32.mxu0 0.0
    %189 = vmatmul.mubr.f32.gmra.mxu0 %v112
    %v190 = vpop.f32.mrf.mxu0
    %v191 = vadd.f32 %v123, %v190
    %v192 = vpop.f32.mrf.mxu0
    %193 = vmatprep.mubr.f32.mxu0 0.0
    %194 = vmatmul.mubr.f32.gmra.mxu0 %v113
    %v195 = vpop.f32.mrf.mxu0
    %v196 = vadd.f32 %v123, %v195
    %v197 = vpop.f32.mrf.mxu0
    %198 = vmatprep.mubr.f32.mxu0 0.0
    %199 = vmatmul.mubr.f32.gmra.mxu0 %v114
    %v200 = vpop.f32.mrf.mxu0
    %v201 = vadd.f32 %v123, %v200
    %v202 = vpop.f32.mrf.mxu0
    %203 = vmatprep.mubr.f32.mxu0 0.0
    %204 = vmatmul.mubr.f32.gmra.mxu0 %v115
    %v205 = vpop.f32.mrf.mxu0
    %v206 = vadd.f32 %v123, %v205
    %v207 = vpop.f32.mrf.mxu0
    %208 = vmatprep.mubr.f32.mxu0 0.0
    %209 = vmatmul.mubr.f32.gmra.mxu0 %v116
    %v210 = vpop.f32.mrf.mxu0
    %v211 = vadd.f32 %v123, %v210
    %v212 = vpop.f32.mrf.mxu0
    %213 = vmatprep.mubr.f32.mxu0 0.0
    %214 = vmatmul.mubr.f32.gmra.mxu0 %v117
    %v215 = vpop.f32.mrf.mxu0
    %v216 = vadd.f32 %v123, %v215
    %v217 = vpop.f32.mrf.mxu0
    %218 = vmatprep.mubr.f32.mxu0 0.0
    %219 = vmatmul.mubr.f32.gmra.mxu0 %v118
    %v220 = vpop.f32.mrf.mxu0
    %v221 = vadd.f32 %v123, %v220
    %v222 = vpop.f32.mrf.mxu0
    %223 = vmatprep.mubr.f32.mxu0 0.0
    %224 = vmatmul.mubr.f32.gmra.mxu0 %v119
    %v225 = vpop.f32.mrf.mxu0
    %v226 = vadd.f32 %v123, %v225
    %v227 = vpop.f32.mrf.mxu0
    %228 = vdwg.mxu0
    %229 = vst [vmem:[#allocation2] sm:$0xff] %v191
    %230 = vst [vmem:[#allocation2 + $0x8] sm:$0xff] %v196
    %231 = vst [vmem:[#allocation2 + $0x10] sm:$0xff] %v201
    %232 = vst [vmem:[#allocation2 + $0x18] sm:$0xff] %v206
    %233 = vst [vmem:[#allocation2 + $0x20] sm:$0xff] %v211
    %234 = vst [vmem:[#allocation2 + $0x28] sm:$0xff] %v216
    %235 = vst [vmem:[#allocation2 + $0x30] sm:$0xff] %v221
    %236 = vst [vmem:[#allocation2 + $0x38] sm:$0xff] %v226
    %v237 = vld [vmem:[#allocation9] sm:$0xff]
    %v238 = vld [vmem:[#allocation9 + $0x8] sm:$0xff]
    %v239 = vld [vmem:[#allocation9 + $0x10] sm:$0xff]
    %v240 = vld [vmem:[#allocation9 + $0x18] sm:$0xff]
    %v241 = vld [vmem:[#allocation9 + $0x20] sm:$0xff]
    %v242 = vld [vmem:[#allocation9 + $0x28] sm:$0xff]
    %v243 = vld [vmem:[#allocation9 + $0x30] sm:$0xff]
    %v244 = vld [vmem:[#allocation9 + $0x38] sm:$0xff]
    %v245 = vld [vmem:[#allocation9 + $0x40] sm:$0xff]
    %v246 = vld [vmem:[#allocation9 + $0x48] sm:$0xff]
    %v247 = vld [vmem:[#allocation9 + $0x50] sm:$0xff]
    %v248 = vld [vmem:[#allocation9 + $0x58] sm:$0xff]
    %v249 = vld [vmem:[#allocation9 + $0x60] sm:$0xff]
    %v250 = vld [vmem:[#allocation9 + $0x68] sm:$0xff]
    %v251 = vld [vmem:[#allocation9 + $0x70] sm:$0xff]
    %v252 = vld [vmem:[#allocation9 + $0x78] sm:$0xff]
    %v253 = vld [vmem:[#allocation2] sm:$0xff]
    %254 = vmatprep.subr.mxu0 0.0
    %255 = vmatpush1.msra.mxu0 %v252
    %256 = vmatprep.subr.mxu0 0.0
    %257 = vmatpush1.msra.mxu0 %v251
    %258 = vmatprep.subr.mxu0 0.0
    %259 = vmatpush1.msra.mxu0 %v250
    %260 = vmatprep.subr.mxu0 0.0
    %261 = vmatpush1.msra.mxu0 %v249
    %262 = vmatprep.subr.mxu0 0.0
    %263 = vmatpush1.msra.mxu0 %v248
    %264 = vmatprep.subr.mxu0 0.0
    %265 = vmatpush1.msra.mxu0 %v247
    %266 = vmatprep.subr.mxu0 0.0
    %267 = vmatpush1.msra.mxu0 %v246
    %268 = vmatprep.subr.mxu0 0.0
    %269 = vmatpush1.msra.mxu0 %v245
    %270 = vmatprep.subr.mxu0 0.0
    %271 = vmatpush1.msra.mxu0 %v244
    %272 = vmatprep.subr.mxu0 0.0
    %273 = vmatpush1.msra.mxu0 %v243
    %274 = vmatprep.subr.mxu0 0.0
    %275 = vmatpush1.msra.mxu0 %v242
    %276 = vmatprep.subr.mxu0 0.0
    %277 = vmatpush1.msra.mxu0 %v241
    %278 = vmatprep.subr.mxu0 0.0
    %279 = vmatpush1.msra.mxu0 %v240
    %280 = vmatprep.subr.mxu0 0.0
    %281 = vmatpush1.msra.mxu0 %v239
    %282 = vmatprep.subr.mxu0 0.0
    %283 = vmatpush1.msra.mxu0 %v238
    %284 = vmatprep.subr.mxu0 0.0
    %285 = vmatpush1.msra.mxu0 %v237
    %286 = vmatprep.subr.mxu0 0.0
    %287 = vmatpush2.msra.mxu0 0.0
    %288 = vmatprep.subr.mxu0 0.0
    %289 = vmatpush2.msra.mxu0 0.0
    %290 = vmatprep.subr.mxu0 0.0
    %291 = vmatpush2.msra.mxu0 0.0
    %292 = vmatprep.subr.mxu0 0.0
    %293 = vmatpush2.msra.mxu0 0.0
    %294 = vmatprep.subr.mxu0 0.0
    %295 = vmatpush2.msra.mxu0 0.0
    %296 = vmatprep.subr.mxu0 0.0
    %297 = vmatpush2.msra.mxu0 0.0
    %298 = vmatprep.subr.mxu0 0.0
    %299 = vmatpush2.msra.mxu0 0.0
    %300 = vmatprep.subr.mxu0 0.0
    %301 = vmatpush2.msra.mxu0 0.0
    %302 = vmatprep.subr.mxu0 0.0
    %303 = vmatpush2.msra.mxu0 0.0
    %304 = vmatprep.subr.mxu0 0.0
    %305 = vmatpush2.msra.mxu0 0.0
    %306 = vmatprep.subr.mxu0 0.0
    %307 = vmatpush2.msra.mxu0 0.0
    %308 = vmatprep.subr.mxu0 0.0
    %309 = vmatpush2.msra.mxu0 0.0
    %310 = vmatprep.subr.mxu0 0.0
    %311 = vmatpush2.msra.mxu0 0.0
    %312 = vmatprep.subr.mxu0 0.0
    %313 = vmatpush2.msra.mxu0 0.0
    %314 = vmatprep.subr.mxu0 0.0
    %315 = vmatpush2.msra.mxu0 0.0
    %316 = vmatprep.subr.mxu0 0.0
    %317 = vmatpush2.msra.mxu0 0.0
    %318 = vmatprep.mubr.f32.mxu0 0.0
    %319 = vmatmul.mubr.f32.gmra.mxu0 0.0
    %v320 = vpop.f32.mrf.mxu0
    %v321 = vadd.f32 %v253, %v320
    %v322 = vpop.f32.mrf.mxu0
    %323 = vdwg.mxu0
    %v324 = vtanh.pop %v321
    %325 = vst [vmem:[#allocation2] sm:$0xff] %v324
    %s326 = scalar_lea.vmem [#allocation2], 8
    %v327 = vld [vmem:[%s326] sm:$0xff]
    %328 = vmatprep.subr.mxu0 0.0
    %329 = vmatpush1.msra.mxu0 %v252
    %330 = vmatprep.subr.mxu0 0.0
    %331 = vmatpush1.msra.mxu0 %v251
    %332 = vmatprep.subr.mxu0 0.0
    %333 = vmatpush1.msra.mxu0 %v250
    %334 = vmatprep.subr.mxu0 0.0
    %335 = vmatpush1.msra.mxu0 %v249
    %336 = vmatprep.subr.mxu0 0.0
    %337 = vmatpush1.msra.mxu0 %v248
    %338 = vmatprep.subr.mxu0 0.0
    %339 = vmatpush1.msra.mxu0 %v247
    %340 = vmatprep.subr.mxu0 0.0
    %341 = vmatpush1.msra.mxu0 %v246
    %342 = vmatprep.subr.mxu0 0.0
    %343 = vmatpush1.msra.mxu0 %v245
    %344 = vmatprep.subr.mxu0 0.0
    %345 = vmatpush1.msra.mxu0 %v244
    %346 = vmatprep.subr.mxu0 0.0
    %347 = vmatpush1.msra.mxu0 %v243
    %348 = vmatprep.subr.mxu0 0.0
    %349 = vmatpush1.msra.mxu0 %v242
    %350 = vmatprep.subr.mxu0 0.0
    %351 = vmatpush1.msra.mxu0 %v241
    %352 = vmatprep.subr.mxu0 0.0
    %353 = vmatpush1.msra.mxu0 %v240
    %354 = vmatprep.subr.mxu0 0.0
    %355 = vmatpush1.msra.mxu0 %v239
    %356 = vmatprep.subr.mxu0 0.0
    %357 = vmatpush1.msra.mxu0 %v238
    %358 = vmatprep.subr.mxu0 0.0
    %359 = vmatpush1.msra.mxu0 %v237
    %360 = vmatprep.subr.mxu0 0.0
    %361 = vmatpush2.msra.mxu0 0.0
    %362 = vmatprep.subr.mxu0 0.0
    %363 = vmatpush2.msra.mxu0 0.0
    %364 = vmatprep.subr.mxu0 0.0
    %365 = vmatpush2.msra.mxu0 0.0
    %366 = vmatprep.subr.mxu0 0.0
    %367 = vmatpush2.msra.mxu0 0.0
    %368 = vmatprep.subr.mxu0 0.0
    %369 = vmatpush2.msra.mxu0 0.0
    %370 = vmatprep.subr.mxu0 0.0
    %371 = vmatpush2.msra.mxu0 0.0
    %372 = vmatprep.subr.mxu0 0.0
    %373 = vmatpush2.msra.mxu0 0.0
    %374 = vmatprep.subr.mxu0 0.0
    %375 = vmatpush2.msra.mxu0 0.0
    %376 = vmatprep.subr.mxu0 0.0
    %377 = vmatpush2.msra.mxu0 0.0
    %378 = vmatprep.subr.mxu0 0.0
    %379 = vmatpush2.msra.mxu0 0.0
    %380 = vmatprep.subr.mxu0 0.0
    %381 = vmatpush2.msra.mxu0 0.0
    %382 = vmatprep.subr.mxu0 0.0
    %383 = vmatpush2.msra.mxu0 0.0
    %384 = vmatprep.subr.mxu0 0.0
    %385 = vmatpush2.msra.mxu0 0.0
    %386 = vmatprep.subr.mxu0 0.0
    %387 = vmatpush2.msra.mxu0 0.0
    %388 = vmatprep.subr.mxu0 0.0
    %389 = vmatpush2.msra.mxu0 0.0
    %390 = vmatprep.subr.mxu0 0.0
    %391 = vmatpush2.msra.mxu0 0.0
    %392 = vmatprep.mubr.f32.mxu0 0.0
    %393 = vmatmul.mubr.f32.gmra.mxu0 %v324
    %v394 = vpop.f32.mrf.mxu0
    %v395 = vadd.f32 %v327, %v394
    %v396 = vpop.f32.mrf.mxu0
    %397 = vdwg.mxu0
    %v398 = vtanh.pop %v395
    %399 = vst [vmem:[%s326] sm:$0xff] %v398
    %s400 = scalar_lea.vmem [#allocation2], 16
    %v401 = vld [vmem:[%s400] sm:$0xff]
    %402 = vmatprep.subr.mxu0 0.0
    %403 = vmatpush1.msra.mxu0 %v252
    %404 = vmatprep.subr.mxu0 0.0
    %405 = vmatpush1.msra.mxu0 %v251
    %406 = vmatprep.subr.mxu0 0.0
    %407 = vmatpush1.msra.mxu0 %v250
    %408 = vmatprep.subr.mxu0 0.0
    %409 = vmatpush1.msra.mxu0 %v249
    %410 = vmatprep.subr.mxu0 0.0
    %411 = vmatpush1.msra.mxu0 %v248
    %412 = vmatprep.subr.mxu0 0.0
    %413 = vmatpush1.msra.mxu0 %v247
    %414 = vmatprep.subr.mxu0 0.0
    %415 = vmatpush1.msra.mxu0 %v246
    %416 = vmatprep.subr.mxu0 0.0
    %417 = vmatpush1.msra.mxu0 %v245
    %418 = vmatprep.subr.mxu0 0.0
    %419 = vmatpush1.msra.mxu0 %v244
    %420 = vmatprep.subr.mxu0 0.0
    %421 = vmatpush1.msra.mxu0 %v243
    %422 = vmatprep.subr.mxu0 0.0
    %423 = vmatpush1.msra.mxu0 %v242
    %424 = vmatprep.subr.mxu0 0.0
    %425 = vmatpush1.msra.mxu0 %v241
    %426 = vmatprep.subr.mxu0 0.0
    %427 = vmatpush1.msra.mxu0 %v240
    %428 = vmatprep.subr.mxu0 0.0
    %429 = vmatpush1.msra.mxu0 %v239
    %430 = vmatprep.subr.mxu0 0.0
    %431 = vmatpush1.msra.mxu0 %v238
    %432 = vmatprep.subr.mxu0 0.0
    %433 = vmatpush1.msra.mxu0 %v237
    %434 = vmatprep.subr.mxu0 0.0
    %435 = vmatpush2.msra.mxu0 0.0
    %436 = vmatprep.subr.mxu0 0.0
    %437 = vmatpush2.msra.mxu0 0.0
    %438 = vmatprep.subr.mxu0 0.0
    %439 = vmatpush2.msra.mxu0 0.0
    %440 = vmatprep.subr.mxu0 0.0
    %441 = vmatpush2.msra.mxu0 0.0
    %442 = vmatprep.subr.mxu0 0.0
    %443 = vmatpush2.msra.mxu0 0.0
    %444 = vmatprep.subr.mxu0 0.0
    %445 = vmatpush2.msra.mxu0 0.0
    %446 = vmatprep.subr.mxu0 0.0
    %447 = vmatpush2.msra.mxu0 0.0
    %448 = vmatprep.subr.mxu0 0.0
    %449 = vmatpush2.msra.mxu0 0.0
    %450 = vmatprep.subr.mxu0 0.0
    %451 = vmatpush2.msra.mxu0 0.0
    %452 = vmatprep.subr.mxu0 0.0
    %453 = vmatpush2.msra.mxu0 0.0
    %454 = vmatprep.subr.mxu0 0.0
    %455 = vmatpush2.msra.mxu0 0.0
    %456 = vmatprep.subr.mxu0 0.0
    %457 = vmatpush2.msra.mxu0 0.0
    %458 = vmatprep.subr.mxu0 0.0
    %459 = vmatpush2.msra.mxu0 0.0
    %460 = vmatprep.subr.mxu0 0.0
    %461 = vmatpush2.msra.mxu0 0.0
    %462 = vmatprep.subr.mxu0 0.0
    %463 = vmatpush2.msra.mxu0 0.0
    %464 = vmatprep.subr.mxu0 0.0
    %465 = vmatpush2.msra.mxu0 0.0
    %466 = vmatprep.mubr.f32.mxu0 0.0
    %467 = vmatmul.mubr.f32.gmra.mxu0 %v398
    %v468 = vpop.f32.mrf.mxu0
    %v469 = vadd.f32 %v401, %v468
    %v470 = vpop.f32.mrf.mxu0
    %471 = vdwg.mxu0
    %v472 = vtanh.pop %v469
    %473 = vst [vmem:[%s400] sm:$0xff] %v472
    %s474 = scalar_lea.vmem [#allocation2], 24
    %v475 = vld [vmem:[%s474] sm:$0xff]
    %476 = vmatprep.subr.mxu0 0.0
    %477 = vmatpush1.msra.mxu0 %v252
    %478 = vmatprep.subr.mxu0 0.0
    %479 = vmatpush1.msra.mxu0 %v251
    %480 = vmatprep.subr.mxu0 0.0
    %481 = vmatpush1.msra.mxu0 %v250
    %482 = vmatprep.subr.mxu0 0.0
    %483 = vmatpush1.msra.mxu0 %v249
    %484 = vmatprep.subr.mxu0 0.0
    %485 = vmatpush1.msra.mxu0 %v248
    %486 = vmatprep.subr.mxu0 0.0
    %487 = vmatpush1.msra.mxu0 %v247
    %488 = vmatprep.subr.mxu0 0.0
    %489 = vmatpush1.msra.mxu0 %v246
    %490 = vmatprep.subr.mxu0 0.0
    %491 = vmatpush1.msra.mxu0 %v245
    %492 = vmatprep.subr.mxu0 0.0
    %493 = vmatpush1.msra.mxu0 %v244
    %494 = vmatprep.subr.mxu0 0.0
    %495 = vmatpush1.msra.mxu0 %v243
    %496 = vmatprep.subr.mxu0 0.0
    %497 = vmatpush1.msra.mxu0 %v242
    %498 = vmatprep.subr.mxu0 0.0
    %499 = vmatpush1.msra.mxu0 %v241
    %500 = vmatprep.subr.mxu0 0.0
    %501 = vmatpush1.msra.mxu0 %v240
    %502 = vmatprep.subr.mxu0 0.0
    %503 = vmatpush1.msra.mxu0 %v239
    %504 = vmatprep.subr.mxu0 0.0
    %505 = vmatpush1.msra.mxu0 %v238
    %506 = vmatprep.subr.mxu0 0.0
    %507 = vmatpush1.msra.mxu0 %v237
    %508 = vmatprep.subr.mxu0 0.0
    %509 = vmatpush2.msra.mxu0 0.0
    %510 = vmatprep.subr.mxu0 0.0
    %511 = vmatpush2.msra.mxu0 0.0
    %512 = vmatprep.subr.mxu0 0.0
    %513 = vmatpush2.msra.mxu0 0.0
    %514 = vmatprep.subr.mxu0 0.0
    %515 = vmatpush2.msra.mxu0 0.0
    %516 = vmatprep.subr.mxu0 0.0
    %517 = vmatpush2.msra.mxu0 0.0
    %518 = vmatprep.subr.mxu0 0.0
    %519 = vmatpush2.msra.mxu0 0.0
    %520 = vmatprep.subr.mxu0 0.0
    %521 = vmatpush2.msra.mxu0 0.0
    %522 = vmatprep.subr.mxu0 0.0
    %523 = vmatpush2.msra.mxu0 0.0
    %524 = vmatprep.subr.mxu0 0.0
    %525 = vmatpush2.msra.mxu0 0.0
    %526 = vmatprep.subr.mxu0 0.0
    %527 = vmatpush2.msra.mxu0 0.0
    %528 = vmatprep.subr.mxu0 0.0
    %529 = vmatpush2.msra.mxu0 0.0
    %530 = vmatprep.subr.mxu0 0.0
    %531 = vmatpush2.msra.mxu0 0.0
    %532 = vmatprep.subr.mxu0 0.0
    %533 = vmatpush2.msra.mxu0 0.0
    %534 = vmatprep.subr.mxu0 0.0
    %535 = vmatpush2.msra.mxu0 0.0
    %536 = vmatprep.subr.mxu0 0.0
    %537 = vmatpush2.msra.mxu0 0.0
    %538 = vmatprep.subr.mxu0 0.0
    %539 = vmatpush2.msra.mxu0 0.0
    %540 = vmatprep.mubr.f32.mxu0 0.0
    %541 = vmatmul.mubr.f32.gmra.mxu0 %v472
    %v542 = vpop.f32.mrf.mxu0
    %v543 = vadd.f32 %v475, %v542
    %v544 = vpop.f32.mrf.mxu0
    %545 = vdwg.mxu0
    %v546 = vtanh.pop %v543
    %547 = vst [vmem:[%s474] sm:$0xff] %v546
    %s548 = scalar_lea.vmem [#allocation2], 32
    %v549 = vld [vmem:[%s548] sm:$0xff]
    %550 = vmatprep.subr.mxu0 0.0
    %551 = vmatpush1.msra.mxu0 %v252
    %552 = vmatprep.subr.mxu0 0.0
    %553 = vmatpush1.msra.mxu0 %v251
    %554 = vmatprep.subr.mxu0 0.0
    %555 = vmatpush1.msra.mxu0 %v250
    %556 = vmatprep.subr.mxu0 0.0
    %557 = vmatpush1.msra.mxu0 %v249
    %558 = vmatprep.subr.mxu0 0.0
    %559 = vmatpush1.msra.mxu0 %v248
    %560 = vmatprep.subr.mxu0 0.0
    %561 = vmatpush1.msra.mxu0 %v247
    %562 = vmatprep.subr.mxu0 0.0
    %563 = vmatpush1.msra.mxu0 %v246
    %564 = vmatprep.subr.mxu0 0.0
    %565 = vmatpush1.msra.mxu0 %v245
    %566 = vmatprep.subr.mxu0 0.0
    %567 = vmatpush1.msra.mxu0 %v244
    %568 = vmatprep.subr.mxu0 0.0
    %569 = vmatpush1.msra.mxu0 %v243
    %570 = vmatprep.subr.mxu0 0.0
    %571 = vmatpush1.msra.mxu0 %v242
    %572 = vmatprep.subr.mxu0 0.0
    %573 = vmatpush1.msra.mxu0 %v241
    %574 = vmatprep.subr.mxu0 0.0
    %575 = vmatpush1.msra.mxu0 %v240
    %576 = vmatprep.subr.mxu0 0.0
    %577 = vmatpush1.msra.mxu0 %v239
    %578 = vmatprep.subr.mxu0 0.0
    %579 = vmatpush1.msra.mxu0 %v238
    %580 = vmatprep.subr.mxu0 0.0
    %581 = vmatpush1.msra.mxu0 %v237
    %582 = vmatprep.subr.mxu0 0.0
    %583 = vmatpush2.msra.mxu0 0.0
    %584 = vmatprep.subr.mxu0 0.0
    %585 = vmatpush2.msra.mxu0 0.0
    %586 = vmatprep.subr.mxu0 0.0
    %587 = vmatpush2.msra.mxu0 0.0
    %588 = vmatprep.subr.mxu0 0.0
    %589 = vmatpush2.msra.mxu0 0.0
    %590 = vmatprep.subr.mxu0 0.0
    %591 = vmatpush2.msra.mxu0 0.0
    %592 = vmatprep.subr.mxu0 0.0
    %593 = vmatpush2.msra.mxu0 0.0
    %594 = vmatprep.subr.mxu0 0.0
    %595 = vmatpush2.msra.mxu0 0.0
    %596 = vmatprep.subr.mxu0 0.0
    %597 = vmatpush2.msra.mxu0 0.0
    %598 = vmatprep.subr.mxu0 0.0
    %599 = vmatpush2.msra.mxu0 0.0
    %600 = vmatprep.subr.mxu0 0.0
    %601 = vmatpush2.msra.mxu0 0.0
    %602 = vmatprep.subr.mxu0 0.0
    %603 = vmatpush2.msra.mxu0 0.0
    %604 = vmatprep.subr.mxu0 0.0
    %605 = vmatpush2.msra.mxu0 0.0
    %606 = vmatprep.subr.mxu0 0.0
    %607 = vmatpush2.msra.mxu0 0.0
    %608 = vmatprep.subr.mxu0 0.0
    %609 = vmatpush2.msra.mxu0 0.0
    %610 = vmatprep.subr.mxu0 0.0
    %611 = vmatpush2.msra.mxu0 0.0
    %612 = vmatprep.subr.mxu0 0.0
    %613 = vmatpush2.msra.mxu0 0.0
    %614 = vmatprep.mubr.f32.mxu0 0.0
    %615 = vmatmul.mubr.f32.gmra.mxu0 %v546
    %v616 = vpop.f32.mrf.mxu0
    %v617 = vadd.f32 %v549, %v616
    %v618 = vpop.f32.mrf.mxu0
    %619 = vdwg.mxu0
    %v620 = vtanh.pop %v617
    %621 = vst [vmem:[%s548] sm:$0xff] %v620
    %s622 = scalar_lea.vmem [#allocation2], 40
    %v623 = vld [vmem:[%s622] sm:$0xff]
    %624 = vmatprep.subr.mxu0 0.0
    %625 = vmatpush1.msra.mxu0 %v252
    %626 = vmatprep.subr.mxu0 0.0
    %627 = vmatpush1.msra.mxu0 %v251
    %628 = vmatprep.subr.mxu0 0.0
    %629 = vmatpush1.msra.mxu0 %v250
    %630 = vmatprep.subr.mxu0 0.0
    %631 = vmatpush1.msra.mxu0 %v249
    %632 = vmatprep.subr.mxu0 0.0
    %633 = vmatpush1.msra.mxu0 %v248
    %634 = vmatprep.subr.mxu0 0.0
    %635 = vmatpush1.msra.mxu0 %v247
    %636 = vmatprep.subr.mxu0 0.0
    %637 = vmatpush1.msra.mxu0 %v246
    %638 = vmatprep.subr.mxu0 0.0
    %639 = vmatpush1.msra.mxu0 %v245
    %640 = vmatprep.subr.mxu0 0.0
    %641 = vmatpush1.msra.mxu0 %v244
    %642 = vmatprep.subr.mxu0 0.0
    %643 = vmatpush1.msra.mxu0 %v243
    %644 = vmatprep.subr.mxu0 0.0
    %645 = vmatpush1.msra.mxu0 %v242
    %646 = vmatprep.subr.mxu0 0.0
    %647 = vmatpush1.msra.mxu0 %v241
    %648 = vmatprep.subr.mxu0 0.0
    %649 = vmatpush1.msra.mxu0 %v240
    %650 = vmatprep.subr.mxu0 0.0
    %651 = vmatpush1.msra.mxu0 %v239
    %652 = vmatprep.subr.mxu0 0.0
    %653 = vmatpush1.msra.mxu0 %v238
    %654 = vmatprep.subr.mxu0 0.0
    %655 = vmatpush1.msra.mxu0 %v237
    %656 = vmatprep.subr.mxu0 0.0
    %657 = vmatpush2.msra.mxu0 0.0
    %658 = vmatprep.subr.mxu0 0.0
    %659 = vmatpush2.msra.mxu0 0.0
    %660 = vmatprep.subr.mxu0 0.0
    %661 = vmatpush2.msra.mxu0 0.0
    %662 = vmatprep.subr.mxu0 0.0
    %663 = vmatpush2.msra.mxu0 0.0
    %664 = vmatprep.subr.mxu0 0.0
    %665 = vmatpush2.msra.mxu0 0.0
    %666 = vmatprep.subr.mxu0 0.0
    %667 = vmatpush2.msra.mxu0 0.0
    %668 = vmatprep.subr.mxu0 0.0
    %669 = vmatpush2.msra.mxu0 0.0
    %670 = vmatprep.subr.mxu0 0.0
    %671 = vmatpush2.msra.mxu0 0.0
    %672 = vmatprep.subr.mxu0 0.0
    %673 = vmatpush2.msra.mxu0 0.0
    %674 = vmatprep.subr.mxu0 0.0
    %675 = vmatpush2.msra.mxu0 0.0
    %676 = vmatprep.subr.mxu0 0.0
    %677 = vmatpush2.msra.mxu0 0.0
    %678 = vmatprep.subr.mxu0 0.0
    %679 = vmatpush2.msra.mxu0 0.0
    %680 = vmatprep.subr.mxu0 0.0
    %681 = vmatpush2.msra.mxu0 0.0
    %682 = vmatprep.subr.mxu0 0.0
    %683 = vmatpush2.msra.mxu0 0.0
    %684 = vmatprep.subr.mxu0 0.0
    %685 = vmatpush2.msra.mxu0 0.0
    %686 = vmatprep.subr.mxu0 0.0
    %687 = vmatpush2.msra.mxu0 0.0
    %688 = vmatprep.mubr.f32.mxu0 0.0
    %689 = vmatmul.mubr.f32.gmra.mxu0 %v620
    %v690 = vpop.f32.mrf.mxu0
    %v691 = vadd.f32 %v623, %v690
    %v692 = vpop.f32.mrf.mxu0
    %693 = vdwg.mxu0
    %v694 = vtanh.pop %v691
    %695 = vst [vmem:[%s622] sm:$0xff] %v694
    %s696 = scalar_lea.vmem [#allocation2], 48
    %v697 = vld [vmem:[%s696] sm:$0xff]
    %698 = vmatprep.subr.mxu0 0.0
    %699 = vmatpush1.msra.mxu0 %v252
    %700 = vmatprep.subr.mxu0 0.0
    %701 = vmatpush1.msra.mxu0 %v251
    %702 = vmatprep.subr.mxu0 0.0
    %703 = vmatpush1.msra.mxu0 %v250
    %704 = vmatprep.subr.mxu0 0.0
    %705 = vmatpush1.msra.mxu0 %v249
    %706 = vmatprep.subr.mxu0 0.0
    %707 = vmatpush1.msra.mxu0 %v248
    %708 = vmatprep.subr.mxu0 0.0
    %709 = vmatpush1.msra.mxu0 %v247
    %710 = vmatprep.subr.mxu0 0.0
    %711 = vmatpush1.msra.mxu0 %v246
    %712 = vmatprep.subr.mxu0 0.0
    %713 = vmatpush1.msra.mxu0 %v245
    %714 = vmatprep.subr.mxu0 0.0
    %715 = vmatpush1.msra.mxu0 %v244
    %716 = vmatprep.subr.mxu0 0.0
    %717 = vmatpush1.msra.mxu0 %v243
    %718 = vmatprep.subr.mxu0 0.0
    %719 = vmatpush1.msra.mxu0 %v242
    %720 = vmatprep.subr.mxu0 0.0
    %721 = vmatpush1.msra.mxu0 %v241
    %722 = vmatprep.subr.mxu0 0.0
    %723 = vmatpush1.msra.mxu0 %v240
    %724 = vmatprep.subr.mxu0 0.0
    %725 = vmatpush1.msra.mxu0 %v239
    %726 = vmatprep.subr.mxu0 0.0
    %727 = vmatpush1.msra.mxu0 %v238
    %728 = vmatprep.subr.mxu0 0.0
    %729 = vmatpush1.msra.mxu0 %v237
    %730 = vmatprep.subr.mxu0 0.0
    %731 = vmatpush2.msra.mxu0 0.0
    %732 = vmatprep.subr.mxu0 0.0
    %733 = vmatpush2.msra.mxu0 0.0
    %734 = vmatprep.subr.mxu0 0.0
    %735 = vmatpush2.msra.mxu0 0.0
    %736 = vmatprep.subr.mxu0 0.0
    %737 = vmatpush2.msra.mxu0 0.0
    %738 = vmatprep.subr.mxu0 0.0
    %739 = vmatpush2.msra.mxu0 0.0
    %740 = vmatprep.subr.mxu0 0.0
    %741 = vmatpush2.msra.mxu0 0.0
    %742 = vmatprep.subr.mxu0 0.0
    %743 = vmatpush2.msra.mxu0 0.0
    %744 = vmatprep.subr.mxu0 0.0
    %745 = vmatpush2.msra.mxu0 0.0
    %746 = vmatprep.subr.mxu0 0.0
    %747 = vmatpush2.msra.mxu0 0.0
    %748 = vmatprep.subr.mxu0 0.0
    %749 = vmatpush2.msra.mxu0 0.0
    %750 = vmatprep.subr.mxu0 0.0
    %751 = vmatpush2.msra.mxu0 0.0
    %752 = vmatprep.subr.mxu0 0.0
    %753 = vmatpush2.msra.mxu0 0.0
    %754 = vmatprep.subr.mxu0 0.0
    %755 = vmatpush2.msra.mxu0 0.0
    %756 = vmatprep.subr.mxu0 0.0
    %757 = vmatpush2.msra.mxu0 0.0
    %758 = vmatprep.subr.mxu0 0.0
    %759 = vmatpush2.msra.mxu0 0.0
    %760 = vmatprep.subr.mxu0 0.0
    %761 = vmatpush2.msra.mxu0 0.0
    %762 = vmatprep.mubr.f32.mxu0 0.0
    %763 = vmatmul.mubr.f32.gmra.mxu0 %v694
    %v764 = vpop.f32.mrf.mxu0
    %v765 = vadd.f32 %v697, %v764
    %v766 = vpop.f32.mrf.mxu0
    %767 = vdwg.mxu0
    %v768 = vtanh.pop %v765
    %769 = vst [vmem:[%s696] sm:$0xff] %v768
    %s770 = scalar_lea.vmem [#allocation2], 56
    %v771 = vld [vmem:[%s770] sm:$0xff]
    %772 = vmatprep.subr.mxu0 0.0
    %773 = vmatpush1.msra.mxu0 %v252
    %774 = vmatprep.subr.mxu0 0.0
    %775 = vmatpush1.msra.mxu0 %v251
    %776 = vmatprep.subr.mxu0 0.0
    %777 = vmatpush1.msra.mxu0 %v250
    %778 = vmatprep.subr.mxu0 0.0
    %779 = vmatpush1.msra.mxu0 %v249
    %780 = vmatprep.subr.mxu0 0.0
    %781 = vmatpush1.msra.mxu0 %v248
    %782 = vmatprep.subr.mxu0 0.0
    %783 = vmatpush1.msra.mxu0 %v247
    %784 = vmatprep.subr.mxu0 0.0
    %785 = vmatpush1.msra.mxu0 %v246
    %786 = vmatprep.subr.mxu0 0.0
    %787 = vmatpush1.msra.mxu0 %v245
    %788 = vmatprep.subr.mxu0 0.0
    %789 = vmatpush1.msra.mxu0 %v244
    %790 = vmatprep.subr.mxu0 0.0
    %791 = vmatpush1.msra.mxu0 %v243
    %792 = vmatprep.subr.mxu0 0.0
    %793 = vmatpush1.msra.mxu0 %v242
    %794 = vmatprep.subr.mxu0 0.0
    %795 = vmatpush1.msra.mxu0 %v241
    %796 = vmatprep.subr.mxu0 0.0
    %797 = vmatpush1.msra.mxu0 %v240
    %798 = vmatprep.subr.mxu0 0.0
    %799 = vmatpush1.msra.mxu0 %v239
    %800 = vmatprep.subr.mxu0 0.0
    %801 = vmatpush1.msra.mxu0 %v238
    %802 = vmatprep.subr.mxu0 0.0
    %803 = vmatpush1.msra.mxu0 %v237
    %804 = vmatprep.subr.mxu0 0.0
    %805 = vmatpush2.msra.mxu0 0.0
    %806 = vmatprep.subr.mxu0 0.0
    %807 = vmatpush2.msra.mxu0 0.0
    %808 = vmatprep.subr.mxu0 0.0
    %809 = vmatpush2.msra.mxu0 0.0
    %810 = vmatprep.subr.mxu0 0.0
    %811 = vmatpush2.msra.mxu0 0.0
    %812 = vmatprep.subr.mxu0 0.0
    %813 = vmatpush2.msra.mxu0 0.0
    %814 = vmatprep.subr.mxu0 0.0
    %815 = vmatpush2.msra.mxu0 0.0
    %816 = vmatprep.subr.mxu0 0.0
    %817 = vmatpush2.msra.mxu0 0.0
    %818 = vmatprep.subr.mxu0 0.0
    %819 = vmatpush2.msra.mxu0 0.0
    %820 = vmatprep.subr.mxu0 0.0
    %821 = vmatpush2.msra.mxu0 0.0
    %822 = vmatprep.subr.mxu0 0.0
    %823 = vmatpush2.msra.mxu0 0.0
    %824 = vmatprep.subr.mxu0 0.0
    %825 = vmatpush2.msra.mxu0 0.0
    %826 = vmatprep.subr.mxu0 0.0
    %827 = vmatpush2.msra.mxu0 0.0
    %828 = vmatprep.subr.mxu0 0.0
    %829 = vmatpush2.msra.mxu0 0.0
    %830 = vmatprep.subr.mxu0 0.0
    %831 = vmatpush2.msra.mxu0 0.0
    %832 = vmatprep.subr.mxu0 0.0
    %833 = vmatpush2.msra.mxu0 0.0
    %834 = vmatprep.subr.mxu0 0.0
    %835 = vmatpush2.msra.mxu0 0.0
    %836 = vmatprep.mubr.f32.mxu0 0.0
    %837 = vmatmul.mubr.f32.gmra.mxu0 %v768
    %v838 = vpop.f32.mrf.mxu0
    %v839 = vadd.f32 %v771, %v838
    %v840 = vpop.f32.mrf.mxu0
    %841 = vdwg.mxu0
    %v842 = vtanh.pop %v839
    %843 = vst [vmem:[%s770] sm:$0xff] %v842
    %v844 = vld [vmem:[#allocation8] sm:$0xff]
    %v845 = vld [vmem:[#allocation8 + $0x8] sm:$0xff]
    %v846 = vld [vmem:[#allocation8 + $0x10] sm:$0xff]
    %v847 = vld [vmem:[#allocation8 + $0x18] sm:$0xff]
    %v848 = vld [vmem:[#allocation8 + $0x20] sm:$0xff]
    %v849 = vld [vmem:[#allocation8 + $0x28] sm:$0xff]
    %v850 = vld [vmem:[#allocation8 + $0x30] sm:$0xff]
    %v851 = vld [vmem:[#allocation8 + $0x38] sm:$0xff]
    %v852 = vld [vmem:[#allocation8 + $0x40] sm:$0xff]
    %v853 = vld [vmem:[#allocation8 + $0x48] sm:$0xff]
    %v854 = vld [vmem:[#allocation8 + $0x50] sm:$0xff]
    %v855 = vld [vmem:[#allocation8 + $0x58] sm:$0xff]
    %v856 = vld [vmem:[#allocation8 + $0x60] sm:$0xff]
    %v857 = vld [vmem:[#allocation8 + $0x68] sm:$0xff]
    %v858 = vld [vmem:[#allocation8 + $0x70] sm:$0xff]
    %v859 = vld [vmem:[#allocation8 + $0x78] sm:$0xff]
    %v860 = vld [vmem:[%s4 + $0x1] sm:$0x1]
    %v861 = vld [vmem:[#allocation2] sm:$0xff]
    %v862 = vld [vmem:[#allocation2 + $0x8] sm:$0xff]
    %v863 = vld [vmem:[#allocation2 + $0x10] sm:$0xff]
    %v864 = vld [vmem:[#allocation2 + $0x18] sm:$0xff]
    %v865 = vld [vmem:[#allocation2 + $0x20] sm:$0xff]
    %v866 = vld [vmem:[#allocation2 + $0x28] sm:$0xff]
    %v867 = vld [vmem:[#allocation2 + $0x30] sm:$0xff]
    %v868 = vld [vmem:[#allocation2 + $0x38] sm:$0xff]
    %v869 = vlaneseq
    %v870 = vshrl.u32 %v869, 7
    %v871 = vsub.s32 0, %v870
    %v872 = vrot.slane %v860, %v871
    %873 = vmatprep.subr.mxu0 0.0
    %874 = vmatpush1.msra.mxu0 %v859
    %875 = vmatprep.subr.mxu0 0.0
    %876 = vmatpush1.msra.mxu0 %v858
    %877 = vmatprep.subr.mxu0 0.0
    %878 = vmatpush1.msra.mxu0 %v857
    %879 = vmatprep.subr.mxu0 0.0
    %880 = vmatpush1.msra.mxu0 %v856
    %881 = vmatprep.subr.mxu0 0.0
    %882 = vmatpush1.msra.mxu0 %v855
    %883 = vmatprep.subr.mxu0 0.0
    %884 = vmatpush1.msra.mxu0 %v854
    %885 = vmatprep.subr.mxu0 0.0
    %886 = vmatpush1.msra.mxu0 %v853
    %887 = vmatprep.subr.mxu0 0.0
    %888 = vmatpush1.msra.mxu0 %v852
    %889 = vmatprep.subr.mxu0 0.0
    %890 = vmatpush1.msra.mxu0 %v851
    %891 = vmatprep.subr.mxu0 0.0
    %892 = vmatpush1.msra.mxu0 %v850
    %893 = vmatprep.subr.mxu0 0.0
    %894 = vmatpush1.msra.mxu0 %v849
    %895 = vmatprep.subr.mxu0 0.0
    %896 = vmatpush1.msra.mxu0 %v848
    %897 = vmatprep.subr.mxu0 0.0
    %898 = vmatpush1.msra.mxu0 %v847
    %899 = vmatprep.subr.mxu0 0.0
    %900 = vmatpush1.msra.mxu0 %v846
    %901 = vmatprep.subr.mxu0 0.0
    %902 = vmatpush1.msra.mxu0 %v845
    %903 = vmatprep.subr.mxu0 0.0
    %904 = vmatpush1.msra.mxu0 %v844
    %905 = vmatprep.subr.mxu0 0.0
    %906 = vmatpush2.msra.mxu0 0.0
    %907 = vmatprep.subr.mxu0 0.0
    %908 = vmatpush2.msra.mxu0 0.0
    %909 = vmatprep.subr.mxu0 0.0
    %910 = vmatpush2.msra.mxu0 0.0
    %911 = vmatprep.subr.mxu0 0.0
    %912 = vmatpush2.msra.mxu0 0.0
    %913 = vmatprep.subr.mxu0 0.0
    %914 = vmatpush2.msra.mxu0 0.0
    %915 = vmatprep.subr.mxu0 0.0
    %916 = vmatpush2.msra.mxu0 0.0
    %917 = vmatprep.subr.mxu0 0.0
    %918 = vmatpush2.msra.mxu0 0.0
    %919 = vmatprep.subr.mxu0 0.0
    %920 = vmatpush2.msra.mxu0 0.0
    %921 = vmatprep.subr.mxu0 0.0
    %922 = vmatpush2.msra.mxu0 0.0
    %923 = vmatprep.subr.mxu0 0.0
    %924 = vmatpush2.msra.mxu0 0.0
    %925 = vmatprep.subr.mxu0 0.0
    %926 = vmatpush2.msra.mxu0 0.0
    %927 = vmatprep.subr.mxu0 0.0
    %928 = vmatpush2.msra.mxu0 0.0
    %929 = vmatprep.subr.mxu0 0.0
    %930 = vmatpush2.msra.mxu0 0.0
    %931 = vmatprep.subr.mxu0 0.0
    %932 = vmatpush2.msra.mxu0 0.0
    %933 = vmatprep.subr.mxu0 0.0
    %934 = vmatpush2.msra.mxu0 0.0
    %935 = vmatprep.subr.mxu0 0.0
    %936 = vmatpush2.msra.mxu0 0.0
    %937 = vmatprep.mubr.f32.mxu0 0.0
    %938 = vmatmul.mubr.f32.gmra.mxu0 %v861
    %v939 = vpop.f32.mrf.mxu0
    %v940 = vadd.f32 %v872, %v939
    %v941 = vpop.f32.mrf.mxu0
    %942 = vmatprep.mubr.f32.mxu0 0.0
    %943 = vmatmul.mubr.f32.gmra.mxu0 %v862
    %v944 = vpop.f32.mrf.mxu0
    %v945 = vadd.f32 %v872, %v944
    %v946 = vpop.f32.mrf.mxu0
    %947 = vmatprep.mubr.f32.mxu0 0.0
    %948 = vmatmul.mubr.f32.gmra.mxu0 %v863
    %v949 = vpop.f32.mrf.mxu0
    %v950 = vadd.f32 %v872, %v949
    %v951 = vpop.f32.mrf.mxu0
    %952 = vmatprep.mubr.f32.mxu0 0.0
    %953 = vmatmul.mubr.f32.gmra.mxu0 %v864
    %v954 = vpop.f32.mrf.mxu0
    %v955 = vadd.f32 %v872, %v954
    %v956 = vpop.f32.mrf.mxu0
    %957 = vmatprep.mubr.f32.mxu0 0.0
    %958 = vmatmul.mubr.f32.gmra.mxu0 %v865
    %v959 = vpop.f32.mrf.mxu0
    %v960 = vadd.f32 %v872, %v959
    %v961 = vpop.f32.mrf.mxu0
    %962 = vmatprep.mubr.f32.mxu0 0.0
    %963 = vmatmul.mubr.f32.gmra.mxu0 %v866
    %v964 = vpop.f32.mrf.mxu0
    %v965 = vadd.f32 %v872, %v964
    %v966 = vpop.f32.mrf.mxu0
    %967 = vmatprep.mubr.f32.mxu0 0.0
    %968 = vmatmul.mubr.f32.gmra.mxu0 %v867
    %v969 = vpop.f32.mrf.mxu0
    %v970 = vadd.f32 %v872, %v969
    %v971 = vpop.f32.mrf.mxu0
    %972 = vmatprep.mubr.f32.mxu0 0.0
    %973 = vmatmul.mubr.f32.gmra.mxu0 %v868
    %v974 = vpop.f32.mrf.mxu0
    %v975 = vadd.f32 %v872, %v974
    %v976 = vpop.f32.mrf.mxu0
    %977 = vdwg.mxu0
    %978 = vst [vmem:[#allocation2] sm:$0xff] %v940
    %979 = vst [vmem:[#allocation2 + $0x8] sm:$0xff] %v945
    %980 = vst [vmem:[#allocation2 + $0x10] sm:$0xff] %v950
    %981 = vst [vmem:[#allocation2 + $0x18] sm:$0xff] %v955
    %982 = vst [vmem:[#allocation2 + $0x20] sm:$0xff] %v960
    %983 = vst [vmem:[#allocation2 + $0x28] sm:$0xff] %v965
    %984 = vst [vmem:[#allocation2 + $0x30] sm:$0xff] %v970
    %985 = vst [vmem:[#allocation2 + $0x38] sm:$0xff] %v975
    %s986 = scalar_lea.vmem [#allocation9], 128
    %v987 = vld [vmem:[%s986] sm:$0xff]
    %v988 = vld [vmem:[%s986 + $0x8] sm:$0xff]
    %v989 = vld [vmem:[%s986 + $0x10] sm:$0xff]
    %v990 = vld [vmem:[%s986 + $0x18] sm:$0xff]
    %v991 = vld [vmem:[%s986 + $0x20] sm:$0xff]
    %v992 = vld [vmem:[%s986 + $0x28] sm:$0xff]
    %v993 = vld [vmem:[%s986 + $0x30] sm:$0xff]
    %v994 = vld [vmem:[%s986 + $0x38] sm:$0xff]
    %v995 = vld [vmem:[%s986 + $0x40] sm:$0xff]
    %v996 = vld [vmem:[%s986 + $0x48] sm:$0xff]
    %v997 = vld [vmem:[%s986 + $0x50] sm:$0xff]
    %v998 = vld [vmem:[%s986 + $0x58] sm:$0xff]
    %v999 = vld [vmem:[%s986 + $0x60] sm:$0xff]
    %v1000 = vld [vmem:[%s986 + $0x68] sm:$0xff]
    %v1001 = vld [vmem:[%s986 + $0x70] sm:$0xff]
    %v1002 = vld [vmem:[%s986 + $0x78] sm:$0xff]
    %v1003 = vld [vmem:[#allocation2] sm:$0xff]
    %1004 = vmatprep.subr.mxu0 0.0
    %1005 = vmatpush1.msra.mxu0 %v1002
    %1006 = vmatprep.subr.mxu0 0.0
    %1007 = vmatpush1.msra.mxu0 %v1001
    %1008 = vmatprep.subr.mxu0 0.0
    %1009 = vmatpush1.msra.mxu0 %v1000
    %1010 = vmatprep.subr.mxu0 0.0
    %1011 = vmatpush1.msra.mxu0 %v999
    %1012 = vmatprep.subr.mxu0 0.0
    %1013 = vmatpush1.msra.mxu0 %v998
    %1014 = vmatprep.subr.mxu0 0.0
    %1015 = vmatpush1.msra.mxu0 %v997
    %1016 = vmatprep.subr.mxu0 0.0
    %1017 = vmatpush1.msra.mxu0 %v996
    %1018 = vmatprep.subr.mxu0 0.0
    %1019 = vmatpush1.msra.mxu0 %v995
    %1020 = vmatprep.subr.mxu0 0.0
    %1021 = vmatpush1.msra.mxu0 %v994
    %1022 = vmatprep.subr.mxu0 0.0
    %1023 = vmatpush1.msra.mxu0 %v993
    %1024 = vmatprep.subr.mxu0 0.0
    %1025 = vmatpush1.msra.mxu0 %v992
    %1026 = vmatprep.subr.mxu0 0.0
    %1027 = vmatpush1.msra.mxu0 %v991
    %1028 = vmatprep.subr.mxu0 0.0
    %1029 = vmatpush1.msra.mxu0 %v990
    %1030 = vmatprep.subr.mxu0 0.0
    %1031 = vmatpush1.msra.mxu0 %v989
    %1032 = vmatprep.subr.mxu0 0.0
    %1033 = vmatpush1.msra.mxu0 %v988
    %1034 = vmatprep.subr.mxu0 0.0
    %1035 = vmatpush1.msra.mxu0 %v987
    %1036 = vmatprep.subr.mxu0 0.0
    %1037 = vmatpush2.msra.mxu0 0.0
    %1038 = vmatprep.subr.mxu0 0.0
    %1039 = vmatpush2.msra.mxu0 0.0
    %1040 = vmatprep.subr.mxu0 0.0
    %1041 = vmatpush2.msra.mxu0 0.0
    %1042 = vmatprep.subr.mxu0 0.0
    %1043 = vmatpush2.msra.mxu0 0.0
    %1044 = vmatprep.subr.mxu0 0.0
    %1045 = vmatpush2.msra.mxu0 0.0
    %1046 = vmatprep.subr.mxu0 0.0
    %1047 = vmatpush2.msra.mxu0 0.0
    %1048 = vmatprep.subr.mxu0 0.0
    %1049 = vmatpush2.msra.mxu0 0.0
    %1050 = vmatprep.subr.mxu0 0.0
    %1051 = vmatpush2.msra.mxu0 0.0
    %1052 = vmatprep.subr.mxu0 0.0
    %1053 = vmatpush2.msra.mxu0 0.0
    %1054 = vmatprep.subr.mxu0 0.0
    %1055 = vmatpush2.msra.mxu0 0.0
    %1056 = vmatprep.subr.mxu0 0.0
    %1057 = vmatpush2.msra.mxu0 0.0
    %1058 = vmatprep.subr.mxu0 0.0
    %1059 = vmatpush2.msra.mxu0 0.0
    %1060 = vmatprep.subr.mxu0 0.0
    %1061 = vmatpush2.msra.mxu0 0.0
    %1062 = vmatprep.subr.mxu0 0.0
    %1063 = vmatpush2.msra.mxu0 0.0
    %1064 = vmatprep.subr.mxu0 0.0
    %1065 = vmatpush2.msra.mxu0 0.0
    %1066 = vmatprep.subr.mxu0 0.0
    %1067 = vmatpush2.msra.mxu0 0.0
    %1068 = vmatprep.mubr.f32.mxu0 0.0
    %1069 = vmatmul.mubr.f32.gmra.mxu0 0.0
    %v1070 = vpop.f32.mrf.mxu0
    %v1071 = vadd.f32 %v1003, %v1070
    %v1072 = vpop.f32.mrf.mxu0
    %1073 = vdwg.mxu0
    %v1074 = vtanh.pop %v1071
    %1075 = vst [vmem:[#allocation2] sm:$0xff] %v1074
    %v1076 = vld [vmem:[%s326] sm:$0xff]
    %1077 = vmatprep.subr.mxu0 0.0
    %1078 = vmatpush1.msra.mxu0 %v1002
    %1079 = vmatprep.subr.mxu0 0.0
    %1080 = vmatpush1.msra.mxu0 %v1001
    %1081 = vmatprep.subr.mxu0 0.0
    %1082 = vmatpush1.msra.mxu0 %v1000
    %1083 = vmatprep.subr.mxu0 0.0
    %1084 = vmatpush1.msra.mxu0 %v999
    %1085 = vmatprep.subr.mxu0 0.0
    %1086 = vmatpush1.msra.mxu0 %v998
    %1087 = vmatprep.subr.mxu0 0.0
    %1088 = vmatpush1.msra.mxu0 %v997
    %1089 = vmatprep.subr.mxu0 0.0
    %1090 = vmatpush1.msra.mxu0 %v996
    %1091 = vmatprep.subr.mxu0 0.0
    %1092 = vmatpush1.msra.mxu0 %v995
    %1093 = vmatprep.subr.mxu0 0.0
    %1094 = vmatpush1.msra.mxu0 %v994
    %1095 = vmatprep.subr.mxu0 0.0
    %1096 = vmatpush1.msra.mxu0 %v993
    %1097 = vmatprep.subr.mxu0 0.0
    %1098 = vmatpush1.msra.mxu0 %v992
    %1099 = vmatprep.subr.mxu0 0.0
    %1100 = vmatpush1.msra.mxu0 %v991
    %1101 = vmatprep.subr.mxu0 0.0
    %1102 = vmatpush1.msra.mxu0 %v990
    %1103 = vmatprep.subr.mxu0 0.0
    %1104 = vmatpush1.msra.mxu0 %v989
    %1105 = vmatprep.subr.mxu0 0.0
    %1106 = vmatpush1.msra.mxu0 %v988
    %1107 = vmatprep.subr.mxu0 0.0
    %1108 = vmatpush1.msra.mxu0 %v987
    %1109 = vmatprep.subr.mxu0 0.0
    %1110 = vmatpush2.msra.mxu0 0.0
    %1111 = vmatprep.subr.mxu0 0.0
    %1112 = vmatpush2.msra.mxu0 0.0
    %1113 = vmatprep.subr.mxu0 0.0
    %1114 = vmatpush2.msra.mxu0 0.0
    %1115 = vmatprep.subr.mxu0 0.0
    %1116 = vmatpush2.msra.mxu0 0.0
    %1117 = vmatprep.subr.mxu0 0.0
    %1118 = vmatpush2.msra.mxu0 0.0
    %1119 = vmatprep.subr.mxu0 0.0
    %1120 = vmatpush2.msra.mxu0 0.0
    %1121 = vmatprep.subr.mxu0 0.0
    %1122 = vmatpush2.msra.mxu0 0.0
    %1123 = vmatprep.subr.mxu0 0.0
    %1124 = vmatpush2.msra.mxu0 0.0
    %1125 = vmatprep.subr.mxu0 0.0
    %1126 = vmatpush2.msra.mxu0 0.0
    %1127 = vmatprep.subr.mxu0 0.0
    %1128 = vmatpush2.msra.mxu0 0.0
    %1129 = vmatprep.subr.mxu0 0.0
    %1130 = vmatpush2.msra.mxu0 0.0
    %1131 = vmatprep.subr.mxu0 0.0
    %1132 = vmatpush2.msra.mxu0 0.0
    %1133 = vmatprep.subr.mxu0 0.0
    %1134 = vmatpush2.msra.mxu0 0.0
    %1135 = vmatprep.subr.mxu0 0.0
    %1136 = vmatpush2.msra.mxu0 0.0
    %1137 = vmatprep.subr.mxu0 0.0
    %1138 = vmatpush2.msra.mxu0 0.0
    %1139 = vmatprep.subr.mxu0 0.0
    %1140 = vmatpush2.msra.mxu0 0.0
    %1141 = vmatprep.mubr.f32.mxu0 0.0
    %1142 = vmatmul.mubr.f32.gmra.mxu0 %v1074
    %v1143 = vpop.f32.mrf.mxu0
    %v1144 = vadd.f32 %v1076, %v1143
    %v1145 = vpop.f32.mrf.mxu0
    %1146 = vdwg.mxu0
    %v1147 = vtanh.pop %v1144
    %1148 = vst [vmem:[%s326] sm:$0xff] %v1147
    %v1149 = vld [vmem:[%s400] sm:$0xff]
    %1150 = vmatprep.subr.mxu0 0.0
    %1151 = vmatpush1.msra.mxu0 %v1002
    %1152 = vmatprep.subr.mxu0 0.0
    %1153 = vmatpush1.msra.mxu0 %v1001
    %1154 = vmatprep.subr.mxu0 0.0
    %1155 = vmatpush1.msra.mxu0 %v1000
    %1156 = vmatprep.subr.mxu0 0.0
    %1157 = vmatpush1.msra.mxu0 %v999
    %1158 = vmatprep.subr.mxu0 0.0
    %1159 = vmatpush1.msra.mxu0 %v998
    %1160 = vmatprep.subr.mxu0 0.0
    %1161 = vmatpush1.msra.mxu0 %v997
    %1162 = vmatprep.subr.mxu0 0.0
    %1163 = vmatpush1.msra.mxu0 %v996
    %1164 = vmatprep.subr.mxu0 0.0
    %1165 = vmatpush1.msra.mxu0 %v995
    %1166 = vmatprep.subr.mxu0 0.0
    %1167 = vmatpush1.msra.mxu0 %v994
    %1168 = vmatprep.subr.mxu0 0.0
    %1169 = vmatpush1.msra.mxu0 %v993
    %1170 = vmatprep.subr.mxu0 0.0
    %1171 = vmatpush1.msra.mxu0 %v992
    %1172 = vmatprep.subr.mxu0 0.0
    %1173 = vmatpush1.msra.mxu0 %v991
    %1174 = vmatprep.subr.mxu0 0.0
    %1175 = vmatpush1.msra.mxu0 %v990
    %1176 = vmatprep.subr.mxu0 0.0
    %1177 = vmatpush1.msra.mxu0 %v989
    %1178 = vmatprep.subr.mxu0 0.0
    %1179 = vmatpush1.msra.mxu0 %v988
    %1180 = vmatprep.subr.mxu0 0.0
    %1181 = vmatpush1.msra.mxu0 %v987
    %1182 = vmatprep.subr.mxu0 0.0
    %1183 = vmatpush2.msra.mxu0 0.0
    %1184 = vmatprep.subr.mxu0 0.0
    %1185 = vmatpush2.msra.mxu0 0.0
    %1186 = vmatprep.subr.mxu0 0.0
    %1187 = vmatpush2.msra.mxu0 0.0
    %1188 = vmatprep.subr.mxu0 0.0
    %1189 = vmatpush2.msra.mxu0 0.0
    %1190 = vmatprep.subr.mxu0 0.0
    %1191 = vmatpush2.msra.mxu0 0.0
    %1192 = vmatprep.subr.mxu0 0.0
    %1193 = vmatpush2.msra.mxu0 0.0
    %1194 = vmatprep.subr.mxu0 0.0
    %1195 = vmatpush2.msra.mxu0 0.0
    %1196 = vmatprep.subr.mxu0 0.0
    %1197 = vmatpush2.msra.mxu0 0.0
    %1198 = vmatprep.subr.mxu0 0.0
    %1199 = vmatpush2.msra.mxu0 0.0
    %1200 = vmatprep.subr.mxu0 0.0
    %1201 = vmatpush2.msra.mxu0 0.0
    %1202 = vmatprep.subr.mxu0 0.0
    %1203 = vmatpush2.msra.mxu0 0.0
    %1204 = vmatprep.subr.mxu0 0.0
    %1205 = vmatpush2.msra.mxu0 0.0
    %1206 = vmatprep.subr.mxu0 0.0
    %1207 = vmatpush2.msra.mxu0 0.0
    %1208 = vmatprep.subr.mxu0 0.0
    %1209 = vmatpush2.msra.mxu0 0.0
    %1210 = vmatprep.subr.mxu0 0.0
    %1211 = vmatpush2.msra.mxu0 0.0
    %1212 = vmatprep.subr.mxu0 0.0
    %1213 = vmatpush2.msra.mxu0 0.0
    %1214 = vmatprep.mubr.f32.mxu0 0.0
    %1215 = vmatmul.mubr.f32.gmra.mxu0 %v1147
    %v1216 = vpop.f32.mrf.mxu0
    %v1217 = vadd.f32 %v1149, %v1216
    %v1218 = vpop.f32.mrf.mxu0
    %1219 = vdwg.mxu0
    %v1220 = vtanh.pop %v1217
    %1221 = vst [vmem:[%s400] sm:$0xff] %v1220
    %v1222 = vld [vmem:[%s474] sm:$0xff]
    %1223 = vmatprep.subr.mxu0 0.0
    %1224 = vmatpush1.msra.mxu0 %v1002
    %1225 = vmatprep.subr.mxu0 0.0
    %1226 = vmatpush1.msra.mxu0 %v1001
    %1227 = vmatprep.subr.mxu0 0.0
    %1228 = vmatpush1.msra.mxu0 %v1000
    %1229 = vmatprep.subr.mxu0 0.0
    %1230 = vmatpush1.msra.mxu0 %v999
    %1231 = vmatprep.subr.mxu0 0.0
    %1232 = vmatpush1.msra.mxu0 %v998
    %1233 = vmatprep.subr.mxu0 0.0
    %1234 = vmatpush1.msra.mxu0 %v997
    %1235 = vmatprep.subr.mxu0 0.0
    %1236 = vmatpush1.msra.mxu0 %v996
    %1237 = vmatprep.subr.mxu0 0.0
    %1238 = vmatpush1.msra.mxu0 %v995
    %1239 = vmatprep.subr.mxu0 0.0
    %1240 = vmatpush1.msra.mxu0 %v994
    %1241 = vmatprep.subr.mxu0 0.0
    %1242 = vmatpush1.msra.mxu0 %v993
    %1243 = vmatprep.subr.mxu0 0.0
    %1244 = vmatpush1.msra.mxu0 %v992
    %1245 = vmatprep.subr.mxu0 0.0
    %1246 = vmatpush1.msra.mxu0 %v991
    %1247 = vmatprep.subr.mxu0 0.0
    %1248 = vmatpush1.msra.mxu0 %v990
    %1249 = vmatprep.subr.mxu0 0.0
    %1250 = vmatpush1.msra.mxu0 %v989
    %1251 = vmatprep.subr.mxu0 0.0
    %1252 = vmatpush1.msra.mxu0 %v988
    %1253 = vmatprep.subr.mxu0 0.0
    %1254 = vmatpush1.msra.mxu0 %v987
    %1255 = vmatprep.subr.mxu0 0.0
    %1256 = vmatpush2.msra.mxu0 0.0
    %1257 = vmatprep.subr.mxu0 0.0
    %1258 = vmatpush2.msra.mxu0 0.0
    %1259 = vmatprep.subr.mxu0 0.0
    %1260 = vmatpush2.msra.mxu0 0.0
    %1261 = vmatprep.subr.mxu0 0.0
    %1262 = vmatpush2.msra.mxu0 0.0
    %1263 = vmatprep.subr.mxu0 0.0
    %1264 = vmatpush2.msra.mxu0 0.0
    %1265 = vmatprep.subr.mxu0 0.0
    %1266 = vmatpush2.msra.mxu0 0.0
    %1267 = vmatprep.subr.mxu0 0.0
    %1268 = vmatpush2.msra.mxu0 0.0
    %1269 = vmatprep.subr.mxu0 0.0
    %1270 = vmatpush2.msra.mxu0 0.0
    %1271 = vmatprep.subr.mxu0 0.0
    %1272 = vmatpush2.msra.mxu0 0.0
    %1273 = vmatprep.subr.mxu0 0.0
    %1274 = vmatpush2.msra.mxu0 0.0
    %1275 = vmatprep.subr.mxu0 0.0
    %1276 = vmatpush2.msra.mxu0 0.0
    %1277 = vmatprep.subr.mxu0 0.0
    %1278 = vmatpush2.msra.mxu0 0.0
    %1279 = vmatprep.subr.mxu0 0.0
    %1280 = vmatpush2.msra.mxu0 0.0
    %1281 = vmatprep.subr.mxu0 0.0
    %1282 = vmatpush2.msra.mxu0 0.0
    %1283 = vmatprep.subr.mxu0 0.0
    %1284 = vmatpush2.msra.mxu0 0.0
    %1285 = vmatprep.subr.mxu0 0.0
    %1286 = vmatpush2.msra.mxu0 0.0
    %1287 = vmatprep.mubr.f32.mxu0 0.0
    %1288 = vmatmul.mubr.f32.gmra.mxu0 %v1220
    %v1289 = vpop.f32.mrf.mxu0
    %v1290 = vadd.f32 %v1222, %v1289
    %v1291 = vpop.f32.mrf.mxu0
    %1292 = vdwg.mxu0
    %v1293 = vtanh.pop %v1290
    %1294 = vst [vmem:[%s474] sm:$0xff] %v1293
    %v1295 = vld [vmem:[%s548] sm:$0xff]
    %1296 = vmatprep.subr.mxu0 0.0
    %1297 = vmatpush1.msra.mxu0 %v1002
    %1298 = vmatprep.subr.mxu0 0.0
    %1299 = vmatpush1.msra.mxu0 %v1001
    %1300 = vmatprep.subr.mxu0 0.0
    %1301 = vmatpush1.msra.mxu0 %v1000
    %1302 = vmatprep.subr.mxu0 0.0
    %1303 = vmatpush1.msra.mxu0 %v999
    %1304 = vmatprep.subr.mxu0 0.0
    %1305 = vmatpush1.msra.mxu0 %v998
    %1306 = vmatprep.subr.mxu0 0.0
    %1307 = vmatpush1.msra.mxu0 %v997
    %1308 = vmatprep.subr.mxu0 0.0
    %1309 = vmatpush1.msra.mxu0 %v996
    %1310 = vmatprep.subr.mxu0 0.0
    %1311 = vmatpush1.msra.mxu0 %v995
    %1312 = vmatprep.subr.mxu0 0.0
    %1313 = vmatpush1.msra.mxu0 %v994
    %1314 = vmatprep.subr.mxu0 0.0
    %1315 = vmatpush1.msra.mxu0 %v993
    %1316 = vmatprep.subr.mxu0 0.0
    %1317 = vmatpush1.msra.mxu0 %v992
    %1318 = vmatprep.subr.mxu0 0.0
    %1319 = vmatpush1.msra.mxu0 %v991
    %1320 = vmatprep.subr.mxu0 0.0
    %1321 = vmatpush1.msra.mxu0 %v990
    %1322 = vmatprep.subr.mxu0 0.0
    %1323 = vmatpush1.msra.mxu0 %v989
    %1324 = vmatprep.subr.mxu0 0.0
    %1325 = vmatpush1.msra.mxu0 %v988
    %1326 = vmatprep.subr.mxu0 0.0
    %1327 = vmatpush1.msra.mxu0 %v987
    %1328 = vmatprep.subr.mxu0 0.0
    %1329 = vmatpush2.msra.mxu0 0.0
    %1330 = vmatprep.subr.mxu0 0.0
    %1331 = vmatpush2.msra.mxu0 0.0
    %1332 = vmatprep.subr.mxu0 0.0
    %1333 = vmatpush2.msra.mxu0 0.0
    %1334 = vmatprep.subr.mxu0 0.0
    %1335 = vmatpush2.msra.mxu0 0.0
    %1336 = vmatprep.subr.mxu0 0.0
    %1337 = vmatpush2.msra.mxu0 0.0
    %1338 = vmatprep.subr.mxu0 0.0
    %1339 = vmatpush2.msra.mxu0 0.0
    %1340 = vmatprep.subr.mxu0 0.0
    %1341 = vmatpush2.msra.mxu0 0.0
    %1342 = vmatprep.subr.mxu0 0.0
    %1343 = vmatpush2.msra.mxu0 0.0
    %1344 = vmatprep.subr.mxu0 0.0
    %1345 = vmatpush2.msra.mxu0 0.0
    %1346 = vmatprep.subr.mxu0 0.0
    %1347 = vmatpush2.msra.mxu0 0.0
    %1348 = vmatprep.subr.mxu0 0.0
    %1349 = vmatpush2.msra.mxu0 0.0
    %1350 = vmatprep.subr.mxu0 0.0
    %1351 = vmatpush2.msra.mxu0 0.0
    %1352 = vmatprep.subr.mxu0 0.0
    %1353 = vmatpush2.msra.mxu0 0.0
    %1354 = vmatprep.subr.mxu0 0.0
    %1355 = vmatpush2.msra.mxu0 0.0
    %1356 = vmatprep.subr.mxu0 0.0
    %1357 = vmatpush2.msra.mxu0 0.0
    %1358 = vmatprep.subr.mxu0 0.0
    %1359 = vmatpush2.msra.mxu0 0.0
    %1360 = vmatprep.mubr.f32.mxu0 0.0
    %1361 = vmatmul.mubr.f32.gmra.mxu0 %v1293
    %v1362 = vpop.f32.mrf.mxu0
    %v1363 = vadd.f32 %v1295, %v1362
    %v1364 = vpop.f32.mrf.mxu0
    %1365 = vdwg.mxu0
    %v1366 = vtanh.pop %v1363
    %1367 = vst [vmem:[%s548] sm:$0xff] %v1366
    %v1368 = vld [vmem:[%s622] sm:$0xff]
    %1369 = vmatprep.subr.mxu0 0.0
    %1370 = vmatpush1.msra.mxu0 %v1002
    %1371 = vmatprep.subr.mxu0 0.0
    %1372 = vmatpush1.msra.mxu0 %v1001
    %1373 = vmatprep.subr.mxu0 0.0
    %1374 = vmatpush1.msra.mxu0 %v1000
    %1375 = vmatprep.subr.mxu0 0.0
    %1376 = vmatpush1.msra.mxu0 %v999
    %1377 = vmatprep.subr.mxu0 0.0
    %1378 = vmatpush1.msra.mxu0 %v998
    %1379 = vmatprep.subr.mxu0 0.0
    %1380 = vmatpush1.msra.mxu0 %v997
    %1381 = vmatprep.subr.mxu0 0.0
    %1382 = vmatpush1.msra.mxu0 %v996
    %1383 = vmatprep.subr.mxu0 0.0
    %1384 = vmatpush1.msra.mxu0 %v995
    %1385 = vmatprep.subr.mxu0 0.0
    %1386 = vmatpush1.msra.mxu0 %v994
    %1387 = vmatprep.subr.mxu0 0.0
    %1388 = vmatpush1.msra.mxu0 %v993
    %1389 = vmatprep.subr.mxu0 0.0
    %1390 = vmatpush1.msra.mxu0 %v992
    %1391 = vmatprep.subr.mxu0 0.0
    %1392 = vmatpush1.msra.mxu0 %v991
    %1393 = vmatprep.subr.mxu0 0.0
    %1394 = vmatpush1.msra.mxu0 %v990
    %1395 = vmatprep.subr.mxu0 0.0
    %1396 = vmatpush1.msra.mxu0 %v989
    %1397 = vmatprep.subr.mxu0 0.0
    %1398 = vmatpush1.msra.mxu0 %v988
    %1399 = vmatprep.subr.mxu0 0.0
    %1400 = vmatpush1.msra.mxu0 %v987
    %1401 = vmatprep.subr.mxu0 0.0
    %1402 = vmatpush2.msra.mxu0 0.0
    %1403 = vmatprep.subr.mxu0 0.0
    %1404 = vmatpush2.msra.mxu0 0.0
    %1405 = vmatprep.subr.mxu0 0.0
    %1406 = vmatpush2.msra.mxu0 0.0
    %1407 = vmatprep.subr.mxu0 0.0
    %1408 = vmatpush2.msra.mxu0 0.0
    %1409 = vmatprep.subr.mxu0 0.0
    %1410 = vmatpush2.msra.mxu0 0.0
    %1411 = vmatprep.subr.mxu0 0.0
    %1412 = vmatpush2.msra.mxu0 0.0
    %1413 = vmatprep.subr.mxu0 0.0
    %1414 = vmatpush2.msra.mxu0 0.0
    %1415 = vmatprep.subr.mxu0 0.0
    %1416 = vmatpush2.msra.mxu0 0.0
    %1417 = vmatprep.subr.mxu0 0.0
    %1418 = vmatpush2.msra.mxu0 0.0
    %1419 = vmatprep.subr.mxu0 0.0
    %1420 = vmatpush2.msra.mxu0 0.0
    %1421 = vmatprep.subr.mxu0 0.0
    %1422 = vmatpush2.msra.mxu0 0.0
    %1423 = vmatprep.subr.mxu0 0.0
    %1424 = vmatpush2.msra.mxu0 0.0
    %1425 = vmatprep.subr.mxu0 0.0
    %1426 = vmatpush2.msra.mxu0 0.0
    %1427 = vmatprep.subr.mxu0 0.0
    %1428 = vmatpush2.msra.mxu0 0.0
    %1429 = vmatprep.subr.mxu0 0.0
    %1430 = vmatpush2.msra.mxu0 0.0
    %1431 = vmatprep.subr.mxu0 0.0
    %1432 = vmatpush2.msra.mxu0 0.0
    %1433 = vmatprep.mubr.f32.mxu0 0.0
    %1434 = vmatmul.mubr.f32.gmra.mxu0 %v1366
    %v1435 = vpop.f32.mrf.mxu0
    %v1436 = vadd.f32 %v1368, %v1435
    %v1437 = vpop.f32.mrf.mxu0
    %1438 = vdwg.mxu0
    %v1439 = vtanh.pop %v1436
    %1440 = vst [vmem:[%s622] sm:$0xff] %v1439
    %v1441 = vld [vmem:[%s696] sm:$0xff]
    %1442 = vmatprep.subr.mxu0 0.0
    %1443 = vmatpush1.msra.mxu0 %v1002
    %1444 = vmatprep.subr.mxu0 0.0
    %1445 = vmatpush1.msra.mxu0 %v1001
    %1446 = vmatprep.subr.mxu0 0.0
    %1447 = vmatpush1.msra.mxu0 %v1000
    %1448 = vmatprep.subr.mxu0 0.0
    %1449 = vmatpush1.msra.mxu0 %v999
    %1450 = vmatprep.subr.mxu0 0.0
    %1451 = vmatpush1.msra.mxu0 %v998
    %1452 = vmatprep.subr.mxu0 0.0
    %1453 = vmatpush1.msra.mxu0 %v997
    %1454 = vmatprep.subr.mxu0 0.0
    %1455 = vmatpush1.msra.mxu0 %v996
    %1456 = vmatprep.subr.mxu0 0.0
    %1457 = vmatpush1.msra.mxu0 %v995
    %1458 = vmatprep.subr.mxu0 0.0
    %1459 = vmatpush1.msra.mxu0 %v994
    %1460 = vmatprep.subr.mxu0 0.0
    %1461 = vmatpush1.msra.mxu0 %v993
    %1462 = vmatprep.subr.mxu0 0.0
    %1463 = vmatpush1.msra.mxu0 %v992
    %1464 = vmatprep.subr.mxu0 0.0
    %1465 = vmatpush1.msra.mxu0 %v991
    %1466 = vmatprep.subr.mxu0 0.0
    %1467 = vmatpush1.msra.mxu0 %v990
    %1468 = vmatprep.subr.mxu0 0.0
    %1469 = vmatpush1.msra.mxu0 %v989
    %1470 = vmatprep.subr.mxu0 0.0
    %1471 = vmatpush1.msra.mxu0 %v988
    %1472 = vmatprep.subr.mxu0 0.0
    %1473 = vmatpush1.msra.mxu0 %v987
    %1474 = vmatprep.subr.mxu0 0.0
    %1475 = vmatpush2.msra.mxu0 0.0
    %1476 = vmatprep.subr.mxu0 0.0
    %1477 = vmatpush2.msra.mxu0 0.0
    %1478 = vmatprep.subr.mxu0 0.0
    %1479 = vmatpush2.msra.mxu0 0.0
    %1480 = vmatprep.subr.mxu0 0.0
    %1481 = vmatpush2.msra.mxu0 0.0
    %1482 = vmatprep.subr.mxu0 0.0
    %1483 = vmatpush2.msra.mxu0 0.0
    %1484 = vmatprep.subr.mxu0 0.0
    %1485 = vmatpush2.msra.mxu0 0.0
    %1486 = vmatprep.subr.mxu0 0.0
    %1487 = vmatpush2.msra.mxu0 0.0
    %1488 = vmatprep.subr.mxu0 0.0
    %1489 = vmatpush2.msra.mxu0 0.0
    %1490 = vmatprep.subr.mxu0 0.0
    %1491 = vmatpush2.msra.mxu0 0.0
    %1492 = vmatprep.subr.mxu0 0.0
    %1493 = vmatpush2.msra.mxu0 0.0
    %1494 = vmatprep.subr.mxu0 0.0
    %1495 = vmatpush2.msra.mxu0 0.0
    %1496 = vmatprep.subr.mxu0 0.0
    %1497 = vmatpush2.msra.mxu0 0.0
    %1498 = vmatprep.subr.mxu0 0.0
    %1499 = vmatpush2.msra.mxu0 0.0
    %1500 = vmatprep.subr.mxu0 0.0
    %1501 = vmatpush2.msra.mxu0 0.0
    %1502 = vmatprep.subr.mxu0 0.0
    %1503 = vmatpush2.msra.mxu0 0.0
    %1504 = vmatprep.subr.mxu0 0.0
    %1505 = vmatpush2.msra.mxu0 0.0
    %1506 = vmatprep.mubr.f32.mxu0 0.0
    %1507 = vmatmul.mubr.f32.gmra.mxu0 %v1439
    %v1508 = vpop.f32.mrf.mxu0
    %v1509 = vadd.f32 %v1441, %v1508
    %v1510 = vpop.f32.mrf.mxu0
    %1511 = vdwg.mxu0
    %v1512 = vtanh.pop %v1509
    %1513 = vst [vmem:[%s696] sm:$0xff] %v1512
    %v1514 = vld [vmem:[%s770] sm:$0xff]
    %1515 = vmatprep.subr.mxu0 0.0
    %1516 = vmatpush1.msra.mxu0 %v1002
    %1517 = vmatprep.subr.mxu0 0.0
    %1518 = vmatpush1.msra.mxu0 %v1001
    %1519 = vmatprep.subr.mxu0 0.0
    %1520 = vmatpush1.msra.mxu0 %v1000
    %1521 = vmatprep.subr.mxu0 0.0
    %1522 = vmatpush1.msra.mxu0 %v999
    %1523 = vmatprep.subr.mxu0 0.0
    %1524 = vmatpush1.msra.mxu0 %v998
    %1525 = vmatprep.subr.mxu0 0.0
    %1526 = vmatpush1.msra.mxu0 %v997
    %1527 = vmatprep.subr.mxu0 0.0
    %1528 = vmatpush1.msra.mxu0 %v996
    %1529 = vmatprep.subr.mxu0 0.0
    %1530 = vmatpush1.msra.mxu0 %v995
    %1531 = vmatprep.subr.mxu0 0.0
    %1532 = vmatpush1.msra.mxu0 %v994
    %1533 = vmatprep.subr.mxu0 0.0
    %1534 = vmatpush1.msra.mxu0 %v993
    %1535 = vmatprep.subr.mxu0 0.0
    %1536 = vmatpush1.msra.mxu0 %v992
    %1537 = vmatprep.subr.mxu0 0.0
    %1538 = vmatpush1.msra.mxu0 %v991
    %1539 = vmatprep.subr.mxu0 0.0
    %1540 = vmatpush1.msra.mxu0 %v990
    %1541 = vmatprep.subr.mxu0 0.0
    %1542 = vmatpush1.msra.mxu0 %v989
    %1543 = vmatprep.subr.mxu0 0.0
    %1544 = vmatpush1.msra.mxu0 %v988
    %1545 = vmatprep.subr.mxu0 0.0
    %1546 = vmatpush1.msra.mxu0 %v987
    %1547 = vmatprep.subr.mxu0 0.0
    %1548 = vmatpush2.msra.mxu0 0.0
    %1549 = vmatprep.subr.mxu0 0.0
    %1550 = vmatpush2.msra.mxu0 0.0
    %1551 = vmatprep.subr.mxu0 0.0
    %1552 = vmatpush2.msra.mxu0 0.0
    %1553 = vmatprep.subr.mxu0 0.0
    %1554 = vmatpush2.msra.mxu0 0.0
    %1555 = vmatprep.subr.mxu0 0.0
    %1556 = vmatpush2.msra.mxu0 0.0
    %1557 = vmatprep.subr.mxu0 0.0
    %1558 = vmatpush2.msra.mxu0 0.0
    %1559 = vmatprep.subr.mxu0 0.0
    %1560 = vmatpush2.msra.mxu0 0.0
    %1561 = vmatprep.subr.mxu0 0.0
    %1562 = vmatpush2.msra.mxu0 0.0
    %1563 = vmatprep.subr.mxu0 0.0
    %1564 = vmatpush2.msra.mxu0 0.0
    %1565 = vmatprep.subr.mxu0 0.0
    %1566 = vmatpush2.msra.mxu0 0.0
    %1567 = vmatprep.subr.mxu0 0.0
    %1568 = vmatpush2.msra.mxu0 0.0
    %1569 = vmatprep.subr.mxu0 0.0
    %1570 = vmatpush2.msra.mxu0 0.0
    %1571 = vmatprep.subr.mxu0 0.0
    %1572 = vmatpush2.msra.mxu0 0.0
    %1573 = vmatprep.subr.mxu0 0.0
    %1574 = vmatpush2.msra.mxu0 0.0
    %1575 = vmatprep.subr.mxu0 0.0
    %1576 = vmatpush2.msra.mxu0 0.0
    %1577 = vmatprep.subr.mxu0 0.0
    %1578 = vmatpush2.msra.mxu0 0.0
    %1579 = vmatprep.mubr.f32.mxu0 0.0
    %1580 = vmatmul.mubr.f32.gmra.mxu0 %v1512
    %v1581 = vpop.f32.mrf.mxu0
    %v1582 = vadd.f32 %v1514, %v1581
    %v1583 = vpop.f32.mrf.mxu0
    %1584 = vdwg.mxu0
    %v1585 = vtanh.pop %v1582
    %1586 = vst [vmem:[%s770] sm:$0xff] %v1585
    %v1587 = vld [vmem:[#allocation11] sm:$0xff]
    %v1588 = vld [vmem:[#allocation11 + $0x8] sm:$0xff]
    %v1589 = vld [vmem:[#allocation11 + $0x10] sm:$0xff]
    %v1590 = vld [vmem:[#allocation11 + $0x18] sm:$0xff]
    %v1591 = vld [vmem:[#allocation11 + $0x20] sm:$0xff]
    %v1592 = vld [vmem:[#allocation11 + $0x28] sm:$0xff]
    %v1593 = vld [vmem:[#allocation11 + $0x30] sm:$0xff]
    %v1594 = vld [vmem:[#allocation11 + $0x38] sm:$0xff]
    %v1595 = vld [vmem:[#allocation11 + $0x40] sm:$0xff]
    %v1596 = vld [vmem:[#allocation11 + $0x48] sm:$0xff]
    %v1597 = vld [vmem:[#allocation11 + $0x50] sm:$0xff]
    %v1598 = vld [vmem:[#allocation11 + $0x58] sm:$0xff]
    %v1599 = vld [vmem:[#allocation11 + $0x60] sm:$0xff]
    %v1600 = vld [vmem:[#allocation11 + $0x68] sm:$0xff]
    %v1601 = vld [vmem:[#allocation11 + $0x70] sm:$0xff]
    %v1602 = vld [vmem:[#allocation11 + $0x78] sm:$0xff]
    %v1603 = vld [vmem:[%s6] sm:$0x1]
    %v1605 = vlaneseq
    %v1606 = vshrl.u32 %v1605, 7
    %v1607 = vsub.s32 0, %v1606
    %v1608 = vrot.slane %v1603, %v1607
    %1610 = vmatprep.subr.mxu0 0.0
    %1611 = vmatpush1.msra.mxu0 %v1602
    %1612 = vmatprep.subr.mxu0 0.0
    %1613 = vmatpush1.msra.mxu0 %v1601
    %1614 = vmatprep.subr.mxu0 0.0
    %1615 = vmatpush1.msra.mxu0 %v1600
    %1616 = vmatprep.subr.mxu0 0.0
    %1617 = vmatpush1.msra.mxu0 %v1599
    %1618 = vmatprep.subr.mxu0 0.0
    %1619 = vmatpush1.msra.mxu0 %v1598
    %1620 = vmatprep.subr.mxu0 0.0
    %1621 = vmatpush1.msra.mxu0 %v1597
    %1622 = vmatprep.subr.mxu0 0.0
    %1623 = vmatpush1.msra.mxu0 %v1596
    %1624 = vmatprep.subr.mxu0 0.0
    %1625 = vmatpush1.msra.mxu0 %v1595
    %1626 = vmatprep.subr.mxu0 0.0
    %1627 = vmatpush1.msra.mxu0 %v1594
    %1628 = vmatprep.subr.mxu0 0.0
    %1629 = vmatpush1.msra.mxu0 %v1593
    %1630 = vmatprep.subr.mxu0 0.0
    %1631 = vmatpush1.msra.mxu0 %v1592
    %1632 = vmatprep.subr.mxu0 0.0
    %1633 = vmatpush1.msra.mxu0 %v1591
    %1634 = vmatprep.subr.mxu0 0.0
    %1635 = vmatpush1.msra.mxu0 %v1590
    %1636 = vmatprep.subr.mxu0 0.0
    %1637 = vmatpush1.msra.mxu0 %v1589
    %1638 = vmatprep.subr.mxu0 0.0
    %1639 = vmatpush1.msra.mxu0 %v1588
    %1640 = vmatprep.subr.mxu0 0.0
    %1641 = vmatpush1.msra.mxu0 %v1587
    %1642 = vmatprep.subr.mxu0 0.0
    %1643 = vmatpush2.msra.mxu0 0.0
    %1644 = vmatprep.subr.mxu0 0.0
    %1645 = vmatpush2.msra.mxu0 0.0
    %1646 = vmatprep.subr.mxu0 0.0
    %1647 = vmatpush2.msra.mxu0 0.0
    %1648 = vmatprep.subr.mxu0 0.0
    %1649 = vmatpush2.msra.mxu0 0.0
    %1650 = vmatprep.subr.mxu0 0.0
    %1651 = vmatpush2.msra.mxu0 0.0
    %1652 = vmatprep.subr.mxu0 0.0
    %1653 = vmatpush2.msra.mxu0 0.0
    %1654 = vmatprep.subr.mxu0 0.0
    %1655 = vmatpush2.msra.mxu0 0.0
    %1656 = vmatprep.subr.mxu0 0.0
    %1657 = vmatpush2.msra.mxu0 0.0
    %1658 = vmatprep.subr.mxu0 0.0
    %1659 = vmatpush2.msra.mxu0 0.0
    %1660 = vmatprep.subr.mxu0 0.0
    %1661 = vmatpush2.msra.mxu0 0.0
    %1662 = vmatprep.subr.mxu0 0.0
    %1663 = vmatpush2.msra.mxu0 0.0
    %1664 = vmatprep.subr.mxu0 0.0
    %1665 = vmatpush2.msra.mxu0 0.0
    %1666 = vmatprep.subr.mxu0 0.0
    %1667 = vmatpush2.msra.mxu0 0.0
    %1668 = vmatprep.subr.mxu0 0.0
    %1669 = vmatpush2.msra.mxu0 0.0
    %1670 = vmatprep.subr.mxu0 0.0
    %1671 = vmatpush2.msra.mxu0 0.0
    %1672 = vmatprep.subr.mxu0 0.0
    %1673 = vmatpush2.msra.mxu0 0.0
    %1674 = vmatprep.mubr.f32.mxu0 0.0
    %1675 = vmatmul.mubr.f32.gmra.mxu0 %v1585
    %v1676 = vpop.f32.mrf.mxu0
    %v1677 = vadd.f32 %v1608, %v1676
    %v1678 = vpop.f32.mrf.mxu0
    %1679 = vdwg.mxu0
    %1680 = vmax.xlane.f32.xlu0 %v1677
    %v1681 = vpop.xlane.xlu0 %1680
    %v1682 = vsub.f32 %v1677, %v1681
    %v1683 = vmul.f32 %v1682, 1.442695
    %v1684 = vpow.pop %v1683
    %1685 = vadd.xlane.f32.xlu0 %v1684
    %v1686 = vpop.xlane.xlu0 %1685
    %v1687 = vlog2.pop %v1686
    %v1688 = vmul.f32 %v1687, 0.6931472
    %v1689 = vsub.f32 %v1682, %v1688
    %1690 = vst [vmem:[#allocation12] sm:$0xff] %v1689
    // Predicated region
    $region50: #{tpu_custom_call.1} parent=1 // pred_check
      _
    $region51: #{tpu_custom_call.1} parent=1 // pred_check_branch
      %1692 = sbr.rel (0) target = $region53
    $region52: #{tpu_custom_call.1} parent=1 // pred_region
      %s1694 = ssub.s32 128, 128
      %1695 = vsyncadd [#allocation5], %s1694
      %s1697 = sshll.u32 [#allocation12], 4
      %s1698 = int_to_ptr.vmem [resolvable:$true] %s1697
      %1700 = dma.vmem_to_hbm [thread:$0]  %s1698, 128, %s7, [#allocation5]
    $region53: #{tpu_custom_call.1} parent=1 // pred_fallthru
      _
    // Predicated region
    $region54: #{tpu_custom_call.1} parent=1 // pred_check
      _
    $region55: #{tpu_custom_call.1} parent=1 // pred_check_branch
      %1702 = sbr.rel (0) target = $region57
    $region56: #{tpu_custom_call.1} parent=1 // pred_region
      %1703 = dma.done [#allocation5], 128
    $region57: #{tpu_custom_call.1} parent=1 // pred_fallthru
      _
    %1704 = vsyncpa [#allocation4], 1
    %1705 = vsyncpa [#allocation7], 1
    %1706 = vsyncpa [#allocation10], 1
    %1707 = vsyncpa [#allocation5], 1

</llo_original>
